<compile_context>
chip_gen: v7x
topology: tpu7x:2x2x1
jax: 0.10.0
libtpu: 0.0.40
codegen_flags: <defaults>
</compile_context>

<pallas_src>
import math

import jax
import jax.numpy as jnp
from jax.experimental import pallas as pl
from jax.experimental.pallas import tpu as pltpu

# Hyper-parameters matching ECNN.__init__
MID_CHANNELS = 15   # conv1 out channels
OUT_CHANNELS = 30   # conv2 out channels
KERNEL_SIZE = 3
STEP = 2            # max-pool window / stride along W

_NCOL = 128         # lane width of the packed parameter slab


def _ecnn_dims(D):
    K = KERNEL_SIZE
    W1 = D - K + 1
    W1P = W1 // STEP
    W2 = W1P - K + 1
    W2P = W2 // STEP
    HID = OUT_CHANNELS * W2P
    HID1 = int(math.floor(math.sqrt(HID)))
    return W1, W1P, W2, W2P, HID, HID1


def _align8(n):
    return ((n + 7) // 8) * 8


def _param_layout(D):
    """Row offset of each parameter block inside the packed (rows, 128) f32 slab."""
    K = KERNEL_SIZE
    C1, C2 = MID_CHANNELS, OUT_CHANNELS
    _, _, _, _, HID, HID1 = _ecnn_dims(D)
    assert max(C1, C2, HID1, 1) <= _NCOL, "parameter block wider than 128 lanes"
    blocks = (("w1", K), ("b1", 1), ("w2", K * C1), ("b2", 1),
              ("wf1", HID), ("bf1", 1), ("wf2", 1), ("bf2", 1))
    off, r = {}, 0
    for name, nrows in blocks:
        off[name] = r                 # every block starts on an (8,128)-tile boundary
        r += _align8(nrows)
    return off, r


def _maxpool_w2s2(h, wp):
    """Max-pool window=2/stride=2 along axis 1 of (B, W, C); drops trailing odd column.

    Single keep-lane sublane-regrouping reshape + one elementwise maximum (VPU).
    """
    B, _, C = h.shape
    h4 = h[:, :2 * wp, :].reshape(B, wp, 2, C)
    return jnp.maximum(h4[:, :, 0, :], h4[:, :, 1, :])


def make_ecnn_kernel(BT, D):
    K = KERNEL_SIZE
    C1, C2 = MID_CHANNELS, OUT_CHANNELS
    W1, W1P, W2, W2P, HID, HID1 = _ecnn_dims(D)
    off, _ = _param_layout(D)

    def kernel(x_ref, p_ref, out_ref):
        x = x_ref[...]                                              # (BT, D) f32

        # ---- load every parameter block ONCE from the packed slab (static slices) ----
        w1 = p_ref[off["w1"]:off["w1"] + K, :C1]                    # (K, C1)
        b1 = p_ref[off["b1"]:off["b1"] + 1, :C1]                    # (1, C1)
        w2 = p_ref[off["w2"]:off["w2"] + K * C1, :C2]               # (K*C1, C2)
        b2 = p_ref[off["b2"]:off["b2"] + 1, :C2]                    # (1, C2)
        wf1 = p_ref[off["wf1"]:off["wf1"] + HID, :HID1]             # (HID, HID1)
        bf1 = p_ref[off["bf1"]:off["bf1"] + 1, :HID1]               # (1, HID1)
        wf2 = p_ref[off["wf2"]:off["wf2"] + 1, :HID1]               # (1, HID1)
        bf2 = p_ref[off["bf2"]:off["bf2"] + 1, 0:1]                 # (1, 1)

        # ---- conv1 (1->C1, kernel (1,K)) as K shifted VPU broadcast-FMAs + ReLU ----
        # One lanes->sublanes relayout of x, then pure VPU work with hoisted weights.
        x3 = x[:, :, None]                                          # (BT, D, 1)
        a1 = x3[:, 0:W1, :] * w1[0:1, :][None]                      # (BT, W1, C1)
        for k in range(1, K):
            a1 = a1 + x3[:, k:k + W1, :] * w1[k:k + 1, :][None]
        h1 = jnp.maximum(a1 + b1[None], 0.0)                        # (BT, W1, C1)
        h1p = _maxpool_w2s2(h1, W1P)                                # (BT, W1P, C1)

        # ---- conv2 (C1->C2): K taps fused into ONE matmul over the K*C1 contraction ----
        lhs2 = jnp.concatenate([h1p[:, k:k + W2, :] for k in range(K)],
                               axis=2)                              # (BT, W2, K*C1)
        a2 = jnp.dot(lhs2.reshape(BT * W2, K * C1), w2,
                     preferred_element_type=jnp.float32)            # (BT*W2, C2)
        h2 = jnp.maximum(a2 + b2, 0.0).reshape(BT, W2, C2)
        h2p = _maxpool_w2s2(h2, W2P)                                # (BT, W2P, C2)

        # ---- flatten width-major (fc1 weights pre-permuted on host to match) ----
        feat = jnp.concatenate([h2p[:, p, :] for p in range(W2P)], axis=1)   # (BT, HID)

        # ---- fc1 (+ dropout: identity in eval mode) + ReLU (MXU) ----
        h3 = jnp.maximum(
            jnp.dot(feat, wf1, preferred_element_type=jnp.float32) + bf1, 0.0)  # (BT, HID1)

        # ---- fc2 on the VPU (mul + lane reduce) + sigmoid via the EUP ----
        logits = jnp.sum(h3 * wf2, axis=1, keepdims=True) + bf2     # (BT, 1)
        out_ref[...] = pl.reciprocal(1.0 + jnp.exp(-logits), approx=True)

    return kernel


def prepare_params(params, D):
    """Convert PyTorch-layout ECNN parameters into ONE packed f32 slab.  Call ONCE."""
    K = KERNEL_SIZE
    C1, C2 = MID_CHANNELS, OUT_CHANNELS
    _, _, _, W2P, HID, HID1 = _ecnn_dims(D)
    off, rows = _param_layout(D)
    w1_t, b1_t, w2_t, b2_t, wf1_t, bf1_t, wf2_t, bf2_t = params

    w1_k = jnp.transpose(w1_t.reshape(C1, K), (1, 0))                              # (K, C1)
    b1_k = b1_t.reshape(1, C1)
    w2_k = jnp.transpose(w2_t.reshape(C2, C1, K), (2, 1, 0)).reshape(K * C1, C2)    # (K*C1, C2)
    b2_k = b2_t.reshape(1, C2)
    # PyTorch flattens pooled h2 as (channel, width); the kernel flattens (width, channel).
    wf1_k = jnp.transpose(wf1_t, (1, 0)).reshape(C2, W2P, HID1)
    wf1_k = jnp.transpose(wf1_k, (1, 0, 2)).reshape(W2P * C2, HID1)                 # (HID, HID1)
    bf1_k = bf1_t.reshape(1, HID1)
    wf2_k = wf2_t.reshape(1, HID1)                                                  # row form (VPU fc2)
    bf2_k = bf2_t.reshape(1, 1)

    slab = jnp.zeros((rows, _NCOL), jnp.float32)
    for name, val in (("w1", w1_k), ("b1", b1_k), ("w2", w2_k), ("b2", b2_k),
                      ("wf1", wf1_k), ("bf1", bf1_k), ("wf2", wf2_k), ("bf2", bf2_k)):
        r, c = val.shape
        slab = slab.at[off[name]:off[name] + r, :c].set(val.astype(jnp.float32))
    return slab


@jax.jit
def ecnn_forward(x_nchw, param_slab):
    """x_nchw: (B, 1, 1, D) float32 (PyTorch NCHW); param_slab from prepare_params()."""
    B = x_nchw.shape[0]
    D = x_nchw.shape[-1]
    assert x_nchw.shape[1] == 1 and x_nchw.shape[2] == 1, "ECNN expects (B, 1, 1, D) input"
    x2d = x_nchw.reshape(B, D).astype(jnp.float32)

    # Batch tiling: B on sublanes, one grid step per BT-sample tile, tiles run in
    # parallel across TensorCores on v7x.  BT<=128 keeps per-step VMEM a few MiB.
    b8 = _align8(B)
    BT = min(128, b8)
    B_pad = ((b8 + BT - 1) // BT) * BT
    if B_pad != B:
        x2d = jnp.pad(x2d, ((0, B_pad - B), (0, 0)))

    _, rows = _param_layout(D)
    kernel = make_ecnn_kernel(BT, D)
    out_pad = pl.pallas_call(
        kernel,
        out_shape=jax.ShapeDtypeStruct((B_pad, 1), jnp.float32),
        grid=(B_pad // BT,),
        in_specs=[
            pl.BlockSpec((BT, D), lambda i: (i, 0)),          # per-tile input rows
            pl.BlockSpec((rows, _NCOL), lambda i: (0, 0)),    # packed params, fetched once
        ],
        out_specs=pl.BlockSpec((BT, 1), lambda i: (i, 0)),
        compiler_params=pltpu.CompilerParams(dimension_semantics=("parallel",)),
    )(x2d, param_slab)
    return out_pad[:B]


def ecnn_reference(x_nchw, params):
    """Pure-JAX (XLA) reference mirroring the PyTorch forward, f32 throughout."""
    K = KERNEL_SIZE
    C1, C2 = MID_CHANNELS, OUT_CHANNELS
    B, _, _, D = x_nchw.shape
    W1, W1P, W2, W2P, HID, HID1 = _ecnn_dims(D)
    w1, b1, w2, b2, wf1, bf1, wf2, bf2 = params
    x = x_nchw.reshape(B, D).astype(jnp.float32)

    cols1 = jnp.stack([x[:, k:k + W1] for k in range(K)], axis=-1)            # (B, W1, K)
    h1 = jax.nn.relu(cols1 @ jnp.transpose(w1.reshape(C1, K)) + b1)           # (B, W1, C1)
    h1p = h1[:, :2 * W1P, :].reshape(B, W1P, 2, C1).max(axis=2)

    lhs2 = jnp.concatenate([h1p[:, k:k + W2, :] for k in range(K)], axis=-1)  # (B, W2, K*C1)
    m2 = jnp.transpose(w2.reshape(C2, C1, K), (2, 1, 0)).reshape(K * C1, C2)
    h2 = jax.nn.relu(lhs2 @ m2 + b2)                                          # (B, W2, C2)
    h2p = h2[:, :2 * W2P, :].reshape(B, W2P, 2, C2).max(axis=2)

    feat = jnp.transpose(h2p, (0, 2, 1)).reshape(B, HID)                      # channel-major (PyTorch)
    h3 = jax.nn.relu(feat @ jnp.transpose(wf1) + bf1)
    logits = h3 @ jnp.transpose(wf2) + bf2
    return jax.nn.sigmoid(logits)


if __name__ == "__main__":
    B, D = 2, 16                                  # input_dimension = 16
    K = KERNEL_SIZE
    W1, W1P, W2, W2P, HID, HID1 = _ecnn_dims(D)   # 14, 7, 5, 2, 60, 7

    key = jax.random.PRNGKey(0)
    ks = jax.random.split(key, 9)
    x = jax.random.normal(ks[0], (B, 1, 1, D), jnp.float32)

    # Deterministic synthetic parameters in PyTorch layout.
    params = (
        0.1 * jax.random.normal(ks[1], (MID_CHANNELS, 1, 1, K), jnp.float32),             # conv1.weight
        0.1 * jax.random.normal(ks[2], (MID_CHANNELS,), jnp.float32),                     # conv1.bias
        0.1 * jax.random.normal(ks[3], (OUT_CHANNELS, MID_CHANNELS, 1, K), jnp.float32),  # conv2.weight
        0.1 * jax.random.normal(ks[4], (OUT_CHANNELS,), jnp.float32),                     # conv2.bias
        0.1 * jax.random.normal(ks[5], (HID1, HID), jnp.float32),                         # fc1.weight
        0.1 * jax.random.normal(ks[6], (HID1,), jnp.float32),                             # fc1.bias
        0.1 * jax.random.normal(ks[7], (1, HID1), jnp.float32),                           # fc2.weight
        0.1 * jax.random.normal(ks[8], (1,), jnp.float32),                                # fc2.bias
    )

    param_slab = prepare_params(params, D)        # host-side packing, done once
    out = ecnn_forward(x, param_slab)
    jax.block_until_ready(out)
    assert out.shape == (B, 1) and out.dtype == jnp.float32

    ref = ecnn_reference(x, params)
    max_err = float(jnp.max(jnp.abs(out - ref)))
    assert max_err < 2e-2, f"kernel vs reference mismatch: max_err={max_err}"

    print("KERNEL_OK")
</pallas_src>

<mosaic_0001>
module attributes {stable_mosaic.version = 11 : i64} {
  func.func @kernel(%arg0: i32, %arg1: memref<8x16xf32, #tpu.memory_space<vmem>>, %arg2: memref<160x128xf32, #tpu.memory_space<vmem>>, %arg3: memref<8x1xf32, #tpu.memory_space<vmem>>) attributes {dimension_semantics = [#tpu.dimension_semantics<parallel>], iteration_bounds = array<i64: 1>, scalar_prefetch = 0 : i64, scratch_operands = 0 : i64, tpu.core_type = #tpu.core_type<tc>, window_params = [{transform_indices = @transform_0, window_bounds = array<i64: 8, 16>}, {pipeline_mode = #tpu.pipeline_mode<synchronous>, transform_indices = @transform_1, window_bounds = array<i64: 160, 128>}, {transform_indices = @transform_2, window_bounds = array<i64: 8, 1>}]} {
    %c0 = arith.constant 0 : index
    %c0_0 = arith.constant 0 : index
    %0 = vector.load %arg1[%c0, %c0_0] : memref<8x16xf32, #tpu.memory_space<vmem>>, vector<8x16xf32>
    %c0_1 = arith.constant 0 : index
    %c0_2 = arith.constant 0 : index
    %1 = vector.load %arg2[%c0_1, %c0_2] : memref<160x128xf32, #tpu.memory_space<vmem>>, vector<3x15xf32>
    %c8 = arith.constant 8 : index
    %c0_3 = arith.constant 0 : index
    %2 = vector.load %arg2[%c8, %c0_3] : memref<160x128xf32, #tpu.memory_space<vmem>>, vector<1x15xf32>
    %c16 = arith.constant 16 : index
    %c0_4 = arith.constant 0 : index
    %3 = vector.load %arg2[%c16, %c0_4] : memref<160x128xf32, #tpu.memory_space<vmem>>, vector<45x30xf32>
    %c64 = arith.constant 64 : index
    %c0_5 = arith.constant 0 : index
    %4 = vector.load %arg2[%c64, %c0_5] : memref<160x128xf32, #tpu.memory_space<vmem>>, vector<1x30xf32>
    %c72 = arith.constant 72 : index
    %c0_6 = arith.constant 0 : index
    %5 = vector.load %arg2[%c72, %c0_6] : memref<160x128xf32, #tpu.memory_space<vmem>>, vector<60x7xf32>
    %c136 = arith.constant 136 : index
    %c0_7 = arith.constant 0 : index
    %6 = vector.load %arg2[%c136, %c0_7] : memref<160x128xf32, #tpu.memory_space<vmem>>, vector<1x7xf32>
    %c144 = arith.constant 144 : index
    %c0_8 = arith.constant 0 : index
    %7 = vector.load %arg2[%c144, %c0_8] : memref<160x128xf32, #tpu.memory_space<vmem>>, vector<1x7xf32>
    %c152 = arith.constant 152 : index
    %c0_9 = arith.constant 0 : index
    %8 = vector.load %arg2[%c152, %c0_9] : memref<160x128xf32, #tpu.memory_space<vmem>>, vector<1x1xf32>
    %9 = vector.shape_cast %0 : vector<8x16xf32> to vector<8x16x1xf32>
    %10 = vector.extract_strided_slice %9 {offsets = [0, 0, 0], sizes = [8, 14, 1], strides = [1, 1, 1]} : vector<8x16x1xf32> to vector<8x14x1xf32>
    %11 = vector.extract_strided_slice %1 {offsets = [0, 0], sizes = [1, 15], strides = [1, 1]} : vector<3x15xf32> to vector<1x15xf32>
    %12 = vector.shape_cast %11 : vector<1x15xf32> to vector<1x1x15xf32>
    %13 = vector.broadcast %10 : vector<8x14x1xf32> to vector<8x14x15xf32>
    %14 = vector.broadcast %12 : vector<1x1x15xf32> to vector<8x14x15xf32>
    %15 = arith.mulf %13, %14 : vector<8x14x15xf32>
    %16 = vector.extract_strided_slice %9 {offsets = [0, 1, 0], sizes = [8, 14, 1], strides = [1, 1, 1]} : vector<8x16x1xf32> to vector<8x14x1xf32>
    %17 = vector.extract_strided_slice %1 {offsets = [1, 0], sizes = [1, 15], strides = [1, 1]} : vector<3x15xf32> to vector<1x15xf32>
    %18 = vector.shape_cast %17 : vector<1x15xf32> to vector<1x1x15xf32>
    %19 = vector.broadcast %16 : vector<8x14x1xf32> to vector<8x14x15xf32>
    %20 = vector.broadcast %18 : vector<1x1x15xf32> to vector<8x14x15xf32>
    %21 = arith.mulf %19, %20 : vector<8x14x15xf32>
    %22 = arith.addf %15, %21 : vector<8x14x15xf32>
    %23 = vector.extract_strided_slice %9 {offsets = [0, 2, 0], sizes = [8, 14, 1], strides = [1, 1, 1]} : vector<8x16x1xf32> to vector<8x14x1xf32>
    %24 = vector.extract_strided_slice %1 {offsets = [2, 0], sizes = [1, 15], strides = [1, 1]} : vector<3x15xf32> to vector<1x15xf32>
    %25 = vector.shape_cast %24 : vector<1x15xf32> to vector<1x1x15xf32>
    %26 = vector.broadcast %23 : vector<8x14x1xf32> to vector<8x14x15xf32>
    %27 = vector.broadcast %25 : vector<1x1x15xf32> to vector<8x14x15xf32>
    %28 = arith.mulf %26, %27 : vector<8x14x15xf32>
    %29 = arith.addf %22, %28 : vector<8x14x15xf32>
    %30 = vector.shape_cast %2 : vector<1x15xf32> to vector<1x1x15xf32>
    %31 = vector.broadcast %30 : vector<1x1x15xf32> to vector<8x14x15xf32>
    %32 = arith.addf %29, %31 : vector<8x14x15xf32>
    %cst = arith.constant 0.000000e+00 : f32
    %33 = vector.broadcast %cst : f32 to vector<8x14x15xf32>
    %34 = arith.maximumf %32, %33 : vector<8x14x15xf32>
    %35 = vector.shape_cast %34 : vector<8x14x15xf32> to vector<8x7x2x15xf32>
    %36 = vector.extract_strided_slice %35 {offsets = [0, 0, 0, 0], sizes = [8, 7, 1, 15], strides = [1, 1, 1, 1]} : vector<8x7x2x15xf32> to vector<8x7x1x15xf32>
    %37 = vector.shape_cast %36 : vector<8x7x1x15xf32> to vector<8x7x15xf32>
    %38 = vector.extract_strided_slice %35 {offsets = [0, 0, 1, 0], sizes = [8, 7, 1, 15], strides = [1, 1, 1, 1]} : vector<8x7x2x15xf32> to vector<8x7x1x15xf32>
    %39 = vector.shape_cast %38 : vector<8x7x1x15xf32> to vector<8x7x15xf32>
    %40 = arith.maximumf %37, %39 : vector<8x7x15xf32>
    %41 = vector.extract_strided_slice %40 {offsets = [0, 0, 0], sizes = [8, 5, 15], strides = [1, 1, 1]} : vector<8x7x15xf32> to vector<8x5x15xf32>
    %42 = vector.extract_strided_slice %40 {offsets = [0, 1, 0], sizes = [8, 5, 15], strides = [1, 1, 1]} : vector<8x7x15xf32> to vector<8x5x15xf32>
    %43 = vector.extract_strided_slice %40 {offsets = [0, 2, 0], sizes = [8, 5, 15], strides = [1, 1, 1]} : vector<8x7x15xf32> to vector<8x5x15xf32>
    %44 = tpu.concatenate %41, %42, %43 in 2 : vector<8x5x15xf32>, vector<8x5x15xf32>, vector<8x5x15xf32> -> vector<8x5x45xf32>
    %45 = vector.shape_cast %44 : vector<8x5x45xf32> to vector<40x45xf32>
    %cst_10 = arith.constant dense<0.000000e+00> : vector<40x30xf32>
    %46 = tpu.matmul %45, %3, %cst_10 {dimension_numbers = #tpu.dot_dimension_numbers<[1], [0], [0], [1], [0, 0, 1, 1], [], []>} : vector<40x45xf32>, vector<45x30xf32>, vector<40x30xf32> -> vector<40x30xf32>
    %47 = vector.broadcast %4 : vector<1x30xf32> to vector<40x30xf32>
    %48 = arith.addf %46, %47 : vector<40x30xf32>
    %cst_11 = arith.constant 0.000000e+00 : f32
    %49 = vector.broadcast %cst_11 : f32 to vector<40x30xf32>
    %50 = arith.maximumf %48, %49 : vector<40x30xf32>
    %51 = vector.shape_cast %50 : vector<40x30xf32> to vector<8x5x30xf32>
    %52 = vector.extract_strided_slice %51 {offsets = [0, 0, 0], sizes = [8, 4, 30], strides = [1, 1, 1]} : vector<8x5x30xf32> to vector<8x4x30xf32>
    %53 = vector.shape_cast %52 : vector<8x4x30xf32> to vector<8x2x2x30xf32>
    %54 = vector.extract_strided_slice %53 {offsets = [0, 0, 0, 0], sizes = [8, 2, 1, 30], strides = [1, 1, 1, 1]} : vector<8x2x2x30xf32> to vector<8x2x1x30xf32>
    %55 = vector.shape_cast %54 : vector<8x2x1x30xf32> to vector<8x2x30xf32>
    %56 = vector.extract_strided_slice %53 {offsets = [0, 0, 1, 0], sizes = [8, 2, 1, 30], strides = [1, 1, 1, 1]} : vector<8x2x2x30xf32> to vector<8x2x1x30xf32>
    %57 = vector.shape_cast %56 : vector<8x2x1x30xf32> to vector<8x2x30xf32>
    %58 = arith.maximumf %55, %57 : vector<8x2x30xf32>
    %59 = vector.extract_strided_slice %58 {offsets = [0, 0, 0], sizes = [8, 1, 30], strides = [1, 1, 1]} : vector<8x2x30xf32> to vector<8x1x30xf32>
    %60 = vector.shape_cast %59 : vector<8x1x30xf32> to vector<8x30xf32>
    %61 = vector.extract_strided_slice %58 {offsets = [0, 1, 0], sizes = [8, 1, 30], strides = [1, 1, 1]} : vector<8x2x30xf32> to vector<8x1x30xf32>
    %62 = vector.shape_cast %61 : vector<8x1x30xf32> to vector<8x30xf32>
    %63 = tpu.concatenate %60, %62 in 1 : vector<8x30xf32>, vector<8x30xf32> -> vector<8x60xf32>
    %cst_12 = arith.constant dense<0.000000e+00> : vector<8x7xf32>
    %64 = tpu.matmul %63, %5, %cst_12 {dimension_numbers = #tpu.dot_dimension_numbers<[1], [0], [0], [1], [0, 0, 1, 1], [], []>} : vector<8x60xf32>, vector<60x7xf32>, vector<8x7xf32> -> vector<8x7xf32>
    %65 = vector.broadcast %6 : vector<1x7xf32> to vector<8x7xf32>
    %66 = arith.addf %64, %65 : vector<8x7xf32>
    %cst_13 = arith.constant 0.000000e+00 : f32
    %67 = vector.broadcast %cst_13 : f32 to vector<8x7xf32>
    %68 = arith.maximumf %66, %67 : vector<8x7xf32>
    %69 = vector.broadcast %7 : vector<1x7xf32> to vector<8x7xf32>
    %70 = arith.mulf %68, %69 : vector<8x7xf32>
    %cst_14 = arith.constant dense<0.000000e+00> : vector<8xf32>
    %71 = vector.multi_reduction <add>, %70, %cst_14 [1] : vector<8x7xf32> to vector<8xf32>
    %72 = vector.shape_cast %71 : vector<8xf32> to vector<8x1xf32>
    %73 = vector.broadcast %8 : vector<1x1xf32> to vector<8x1xf32>
    %74 = arith.addf %72, %73 : vector<8x1xf32>
    %cst_15 = arith.constant 0.000000e+00 : f32
    %75 = vector.broadcast %cst_15 : f32 to vector<8x1xf32>
    %76 = arith.subf %75, %74 : vector<8x1xf32>
    %77 = math.exp %76 : vector<8x1xf32>
    %cst_16 = arith.constant 1.000000e+00 : f32
    %78 = vector.broadcast %cst_16 : f32 to vector<8x1xf32>
    %79 = arith.addf %78, %77 : vector<8x1xf32>
    %80 = tpu.reciprocal %79 {approx = true} : vector<8x1xf32> -> vector<8x1xf32>
    %c0_17 = arith.constant 0 : index
    %c0_18 = arith.constant 0 : index
    %81 = vector.load %arg3[%c0_17, %c0_18] : memref<8x1xf32, #tpu.memory_space<vmem>>, vector<8x1xf32>
    tpu.vector_store %arg3[%c0_17, %c0_18], %80 {strides = array<i32>} : memref<8x1xf32, #tpu.memory_space<vmem>>, vector<8x1xf32>,
    return
  }
  func.func @transform_0(%arg0: i32) -> (i32, i32) {
    %c0_i32 = arith.constant 0 : i32
    %c0_i32_0 = arith.constant 0 : i32
    return %arg0, %c0_i32 : i32, i32
  }
  func.func @transform_1(%arg0: i32) -> (i32, i32) {
    %c0_i32 = arith.constant 0 : i32
    %c0_i32_0 = arith.constant 0 : i32
    %c0_i32_1 = arith.constant 0 : i32
    return %c0_i32, %c0_i32_0 : i32, i32
  }
  func.func @transform_2(%arg0: i32) -> (i32, i32) {
    %c0_i32 = arith.constant 0 : i32
    %c0_i32_0 = arith.constant 0 : i32
    return %arg0, %c0_i32 : i32, i32
  }
}

</mosaic_0001>

<llo_original>
// kernel: ecnn_forward.1
$region0: #{ecnn_forward.1}
  #allocation0 [shape = 'u32[]', space=smem, size = 0x4, offset = 0x4, fixed_abs, tag = 'smem constant byte address 0x4 - core index']
  #allocation1 [shape = 'u32[144,128]{1,0:T(1,128)}', space=vmem, size = 0x12000, scoped, tag = 'internal scratch']
  %s0 = inlined_call_operand.vmem [shape: f32[8,16], index: 0, kind: input, shape index: {}]
  %s1 = inlined_call_operand.hbm [shape: f32[160,128], index: 1, kind: input, shape index: {}]
  %s2 = inlined_call_operand.vmem [shape: f32[8,1], index: 2, kind: output, shape index: {}]
  %s3 = sld [smem:[#allocation0]]
  $region22: #{ecnn_forward.1} parent=0
    _
  %s5 = ssub.s32 1, %s3
  %s6 = scalar_select 0, %s5, %s3
  $region1: #{ecnn_forward.1} parent=0
    #allocation2 [shape = 'u8[81920]{0}', space=vmem, size = 0x14000, scoped, tag = 'input window, operand 1, single buffered']
    #allocation3 [shape = 's32[1]{0}', space=sflag, size = 0x4, scoped, tag = 'scoped memory for ecnn_forward.1']
    %7 = vsyncpa [#allocation3], 0
    // Predicated region
    $region2: #{ecnn_forward.1} parent=1 // pred_check
      _
    $region3: #{ecnn_forward.1} parent=1 // pred_check_branch
      %9 = sbr.rel (0) target = $region5
    $region4: #{ecnn_forward.1} parent=1 // pred_region
      _
    $region5: #{ecnn_forward.1} parent=1 // pred_fallthru
      _
    // Predicated region
    $region6: #{ecnn_forward.1} parent=1 // pred_check
      _
    $region7: #{ecnn_forward.1} parent=1 // pred_check_branch
      %11 = sbr.rel (0) target = $region9
    $region8: #{ecnn_forward.1} parent=1 // pred_region
      %s13 = ssub.s32 2560, 2560
      %14 = vsyncadd [#allocation3], %s13
      %s15 = sshll.u32 [#allocation2], 4
      %s16 = int_to_ptr.vmem [resolvable:$true] %s15
      %21 = dma.hbm_to_vmem [thread:$0]  %s1, 2560, %s16, [#allocation3], 128, 128, 8
    $region9: #{ecnn_forward.1} parent=1 // pred_fallthru
      _
    // Predicated region
    $region10: #{ecnn_forward.1} parent=1 // pred_check
      _
    $region11: #{ecnn_forward.1} parent=1 // pred_check_branch
      %23 = sbr.rel (0) target = $region13
    $region12: #{ecnn_forward.1} parent=1 // pred_region
      %24 = dma.done [#allocation3], 2560
    $region13: #{ecnn_forward.1} parent=1 // pred_fallthru
      _
    %v25 = vld [vmem:[%s0] sm:$0xff]
    %v26 = vld [vmem:[#allocation2] sm:$0x7]
    %v27 = vld [vmem:[#allocation2 + $0x8] sm:$0x1]
    %v28 = vld [vmem:[#allocation2 + $0x10] sm:$0xff]
    %v29 = vld [vmem:[#allocation2 + $0x18] sm:$0xff]
    %v30 = vld [vmem:[#allocation2 + $0x20] sm:$0xff]
    %v31 = vld [vmem:[#allocation2 + $0x28] sm:$0xff]
    %v32 = vld [vmem:[#allocation2 + $0x30] sm:$0xff]
    %v33 = vld [vmem:[#allocation2 + $0x38] sm:$0x1f]
    %v34 = vld [vmem:[#allocation2 + $0x40] sm:$0x1]
    %v35 = vld [vmem:[#allocation2 + $0x48] sm:$0xff]
    %v36 = vld [vmem:[#allocation2 + $0x50] sm:$0xff]
    %v37 = vld [vmem:[#allocation2 + $0x58] sm:$0xff]
    %v38 = vld [vmem:[#allocation2 + $0x60] sm:$0xff]
    %v39 = vld [vmem:[#allocation2 + $0x68] sm:$0xff]
    %v40 = vld [vmem:[#allocation2 + $0x70] sm:$0xff]
    %v41 = vld [vmem:[#allocation2 + $0x78] sm:$0xff]
    %v42 = vld [vmem:[#allocation2 + $0x80] sm:$0xf]
    %v43 = vld [vmem:[#allocation2 + $0x88] sm:$0x1]
    %v44 = vld [vmem:[#allocation2 + $0x90] sm:$0x1]
    %v45 = vld [vmem:[#allocation2 + $0x98] sm:$0x1]
    %v46 = vlaneseq
    %v47 = vshrl.u32 %v46, 7
    %v48 = vsub.s32 0, %v47
    %v49 = vrot.slane %v25, %v48
    %51 = vbcast.lane.b32.xlu0 %v49, 256
    %v52 = vpop.permute.xlu0 %51
    %s54 = sor.u32 256, 8
    %55 = vbcast.lane.b32.xlu0 %v49, %s54
    %v56 = vpop.permute.xlu0 %55
    %v57 = vlaneseq
    %v58 = vshrl.u32 %v57, 7
    %v59 = vsub.s32 1, %v58
    %v60 = vrot.slane %v25, %v59
    %62 = vbcast.lane.b32.xlu0 %v60, 256
    %v63 = vpop.permute.xlu0 %62
    %s65 = sor.u32 256, 8
    %66 = vbcast.lane.b32.xlu0 %v60, %s65
    %v67 = vpop.permute.xlu0 %66
    %v68 = vlaneseq
    %v69 = vshrl.u32 %v68, 7
    %v70 = vsub.s32 2, %v69
    %v71 = vrot.slane %v25, %v70
    %73 = vbcast.lane.b32.xlu0 %v71, 256
    %v74 = vpop.permute.xlu0 %73
    %s76 = sor.u32 256, 8
    %77 = vbcast.lane.b32.xlu0 %v71, %s76
    %v78 = vpop.permute.xlu0 %77
    %v79 = vlaneseq
    %v80 = vshrl.u32 %v79, 7
    %v81 = vsub.s32 3, %v80
    %v82 = vrot.slane %v25, %v81
    %84 = vbcast.lane.b32.xlu0 %v82, 256
    %v85 = vpop.permute.xlu0 %84
    %s87 = sor.u32 256, 8
    %88 = vbcast.lane.b32.xlu0 %v82, %s87
    %v89 = vpop.permute.xlu0 %88
    %v90 = vlaneseq
    %v91 = vshrl.u32 %v90, 7
    %v92 = vsub.s32 4, %v91
    %v93 = vrot.slane %v25, %v92
    %95 = vbcast.lane.b32.xlu0 %v93, 256
    %v96 = vpop.permute.xlu0 %95
    %s98 = sor.u32 256, 8
    %99 = vbcast.lane.b32.xlu0 %v93, %s98
    %v100 = vpop.permute.xlu0 %99
    %v101 = vlaneseq
    %v102 = vshrl.u32 %v101, 7
    %v103 = vsub.s32 5, %v102
    %v104 = vrot.slane %v25, %v103
    %106 = vbcast.lane.b32.xlu0 %v104, 256
    %v107 = vpop.permute.xlu0 %106
    %s109 = sor.u32 256, 8
    %110 = vbcast.lane.b32.xlu0 %v104, %s109
    %v111 = vpop.permute.xlu0 %110
    %v112 = vlaneseq
    %v113 = vshrl.u32 %v112, 7
    %v114 = vsub.s32 6, %v113
    %v115 = vrot.slane %v25, %v114
    %117 = vbcast.lane.b32.xlu0 %v115, 256
    %v118 = vpop.permute.xlu0 %117
    %s120 = sor.u32 256, 8
    %121 = vbcast.lane.b32.xlu0 %v115, %s120
    %v122 = vpop.permute.xlu0 %121
    %v123 = vlaneseq
    %v124 = vshrl.u32 %v123, 7
    %v125 = vsub.s32 7, %v124
    %v126 = vrot.slane %v25, %v125
    %128 = vbcast.lane.b32.xlu0 %v126, 256
    %v129 = vpop.permute.xlu0 %128
    %s131 = sor.u32 256, 8
    %132 = vbcast.lane.b32.xlu0 %v126, %s131
    %v133 = vpop.permute.xlu0 %132
    %v134 = vlaneseq
    %v135 = vshrl.u32 %v134, 7
    %v136 = vsub.s32 0, %v135
    %v137 = vrot.slane %v26, %v136
    %v138 = vmul.f32 %v52, %v137
    %v139 = vmul.f32 %v56, %v137
    %v140 = vmul.f32 %v63, %v137
    %v141 = vmul.f32 %v67, %v137
    %v142 = vmul.f32 %v74, %v137
    %v143 = vmul.f32 %v78, %v137
    %v144 = vmul.f32 %v85, %v137
    %v145 = vmul.f32 %v89, %v137
    %v146 = vmul.f32 %v96, %v137
    %v147 = vmul.f32 %v100, %v137
    %v148 = vmul.f32 %v107, %v137
    %v149 = vmul.f32 %v111, %v137
    %v150 = vmul.f32 %v118, %v137
    %v151 = vmul.f32 %v122, %v137
    %v152 = vmul.f32 %v129, %v137
    %v153 = vmul.f32 %v133, %v137
    %v154 = vlaneseq
    %v155 = vshrl.u32 %v154, 7
    %v156 = vsub.s32 1, %v155
    %v157 = vrot.slane %v26, %v156
    %v158 = vmul.f32 %v52, %v157
    %v159 = vmul.f32 %v56, %v157
    %v160 = vmul.f32 %v63, %v157
    %v161 = vmul.f32 %v67, %v157
    %v162 = vmul.f32 %v74, %v157
    %v163 = vmul.f32 %v78, %v157
    %v164 = vmul.f32 %v85, %v157
    %v165 = vmul.f32 %v89, %v157
    %v166 = vmul.f32 %v96, %v157
    %v167 = vmul.f32 %v100, %v157
    %v168 = vmul.f32 %v107, %v157
    %v169 = vmul.f32 %v111, %v157
    %v170 = vmul.f32 %v118, %v157
    %v171 = vmul.f32 %v122, %v157
    %v172 = vmul.f32 %v129, %v157
    %v173 = vmul.f32 %v133, %v157
    %vm190 = vcmask 1046528
    %v191 = vrot.slane %v158, 1
    %v192 = vrot.slane %v159, 1
    %v193 = vsel %vm190, %v191, %v192
    %v194 = vrot.slane %v160, 1
    %v195 = vrot.slane %v161, 1
    %v196 = vsel %vm190, %v194, %v195
    %v197 = vrot.slane %v162, 1
    %v198 = vrot.slane %v163, 1
    %v199 = vsel %vm190, %v197, %v198
    %v200 = vrot.slane %v164, 1
    %v201 = vrot.slane %v165, 1
    %v202 = vsel %vm190, %v200, %v201
    %v203 = vrot.slane %v166, 1
    %v204 = vrot.slane %v167, 1
    %v205 = vsel %vm190, %v203, %v204
    %v206 = vrot.slane %v168, 1
    %v207 = vrot.slane %v169, 1
    %v208 = vsel %vm190, %v206, %v207
    %v209 = vrot.slane %v170, 1
    %v210 = vrot.slane %v171, 1
    %v211 = vsel %vm190, %v209, %v210
    %v212 = vrot.slane %v172, 1
    %v213 = vrot.slane %v173, 1
    %v214 = vsel %vm190, %v212, %v213
    %v231 = vadd.f32 %v138, %v193
    %v232 = vadd.f32 %v139, %v192
    %v233 = vadd.f32 %v140, %v196
    %v234 = vadd.f32 %v141, %v195
    %v235 = vadd.f32 %v142, %v199
    %v236 = vadd.f32 %v143, %v198
    %v237 = vadd.f32 %v144, %v202
    %v238 = vadd.f32 %v145, %v201
    %v239 = vadd.f32 %v146, %v205
    %v240 = vadd.f32 %v147, %v204
    %v241 = vadd.f32 %v148, %v208
    %v242 = vadd.f32 %v149, %v207
    %v243 = vadd.f32 %v150, %v211
    %v244 = vadd.f32 %v151, %v210
    %v245 = vadd.f32 %v152, %v214
    %v246 = vadd.f32 %v153, %v213
    %v247 = vlaneseq
    %v248 = vshrl.u32 %v247, 7
    %v249 = vsub.s32 2, %v248
    %v250 = vrot.slane %v26, %v249
    %v251 = vmul.f32 %v52, %v250
    %v252 = vmul.f32 %v56, %v250
    %v253 = vmul.f32 %v63, %v250
    %v254 = vmul.f32 %v67, %v250
    %v255 = vmul.f32 %v74, %v250
    %v256 = vmul.f32 %v78, %v250
    %v257 = vmul.f32 %v85, %v250
    %v258 = vmul.f32 %v89, %v250
    %v259 = vmul.f32 %v96, %v250
    %v260 = vmul.f32 %v100, %v250
    %v261 = vmul.f32 %v107, %v250
    %v262 = vmul.f32 %v111, %v250
    %v263 = vmul.f32 %v118, %v250
    %v264 = vmul.f32 %v122, %v250
    %v265 = vmul.f32 %v129, %v250
    %v266 = vmul.f32 %v133, %v250
    %vm283 = vcmask 1045504
    %v284 = vrot.slane %v251, 2
    %v285 = vrot.slane %v252, 2
    %v286 = vsel %vm283, %v284, %v285
    %v287 = vrot.slane %v253, 2
    %v288 = vrot.slane %v254, 2
    %v289 = vsel %vm283, %v287, %v288
    %v290 = vrot.slane %v255, 2
    %v291 = vrot.slane %v256, 2
    %v292 = vsel %vm283, %v290, %v291
    %v293 = vrot.slane %v257, 2
    %v294 = vrot.slane %v258, 2
    %v295 = vsel %vm283, %v293, %v294
    %v296 = vrot.slane %v259, 2
    %v297 = vrot.slane %v260, 2
    %v298 = vsel %vm283, %v296, %v297
    %v299 = vrot.slane %v261, 2
    %v300 = vrot.slane %v262, 2
    %v301 = vsel %vm283, %v299, %v300
    %v302 = vrot.slane %v263, 2
    %v303 = vrot.slane %v264, 2
    %v304 = vsel %vm283, %v302, %v303
    %v305 = vrot.slane %v265, 2
    %v306 = vrot.slane %v266, 2
    %v307 = vsel %vm283, %v305, %v306
    %v324 = vadd.f32 %v231, %v286
    %v325 = vadd.f32 %v232, %v285
    %v326 = vadd.f32 %v233, %v289
    %v327 = vadd.f32 %v234, %v288
    %v328 = vadd.f32 %v235, %v292
    %v329 = vadd.f32 %v236, %v291
    %v330 = vadd.f32 %v237, %v295
    %v331 = vadd.f32 %v238, %v294
    %v332 = vadd.f32 %v239, %v298
    %v333 = vadd.f32 %v240, %v297
    %v334 = vadd.f32 %v241, %v301
    %v335 = vadd.f32 %v242, %v300
    %v336 = vadd.f32 %v243, %v304
    %v337 = vadd.f32 %v244, %v303
    %v338 = vadd.f32 %v245, %v307
    %v339 = vadd.f32 %v246, %v306
    %v340 = vlaneseq
    %v341 = vshrl.u32 %v340, 7
    %v342 = vsub.s32 0, %v341
    %v343 = vrot.slane %v27, %v342
    %v344 = vadd.f32 %v324, %v343
    %v345 = vadd.f32 %v325, %v343
    %v346 = vadd.f32 %v326, %v343
    %v347 = vadd.f32 %v327, %v343
    %v348 = vadd.f32 %v328, %v343
    %v349 = vadd.f32 %v329, %v343
    %v350 = vadd.f32 %v330, %v343
    %v351 = vadd.f32 %v331, %v343
    %v352 = vadd.f32 %v332, %v343
    %v353 = vadd.f32 %v333, %v343
    %v354 = vadd.f32 %v334, %v343
    %v355 = vadd.f32 %v335, %v343
    %v356 = vadd.f32 %v336, %v343
    %v357 = vadd.f32 %v337, %v343
    %v358 = vadd.f32 %v338, %v343
    %v359 = vadd.f32 %v339, %v343
    %v360 = vmax.f32 %v344, 0.0
    %v361 = vmax.f32 %v345, 0.0
    %v362 = vmax.f32 %v346, 0.0
    %v363 = vmax.f32 %v347, 0.0
    %v364 = vmax.f32 %v348, 0.0
    %v365 = vmax.f32 %v349, 0.0
    %v366 = vmax.f32 %v350, 0.0
    %v367 = vmax.f32 %v351, 0.0
    %v368 = vmax.f32 %v352, 0.0
    %v369 = vmax.f32 %v353, 0.0
    %v370 = vmax.f32 %v354, 0.0
    %v371 = vmax.f32 %v355, 0.0
    %v372 = vmax.f32 %v356, 0.0
    %v373 = vmax.f32 %v357, 0.0
    %v374 = vmax.f32 %v358, 0.0
    %v375 = vmax.f32 %v359, 0.0
    %v392 = vcombine.high %v360, %v360
    %v394 = vunpack.c.l.s4 1983009808
    %v395 = vunpack.c.0.s8 %v394
    %v396 = vlaneseq
    %v397 = vshrl.u32 %v396, 7
    %v398 = vsub.s32 %v395, %v397
    %v399 = vrot.slane %v360, %v398
    %v401 = vunpack.c.l.s4 1983009808
    %v402 = vunpack.c.0.s8 %v401
    %v403 = vlaneseq
    %v404 = vshrl.u32 %v403, 7
    %v405 = vsub.s32 %v402, %v404
    %v406 = vrot.slane %v392, %v405
    %v407 = vcombine.high %v399, %v399
    %v408 = vcombine.high %v406, %v406
    %v409 = vcombine.high %v361, %v361
    %v411 = vunpack.c.l.s4 1983009808
    %v412 = vunpack.c.0.s8 %v411
    %v413 = vlaneseq
    %v414 = vshrl.u32 %v413, 7
    %v415 = vsub.s32 %v412, %v414
    %v416 = vrot.slane %v361, %v415
    %v418 = vunpack.c.l.s4 1983009808
    %v419 = vunpack.c.0.s8 %v418
    %v420 = vlaneseq
    %v421 = vshrl.u32 %v420, 7
    %v422 = vsub.s32 %v419, %v421
    %v423 = vrot.slane %v409, %v422
    %v424 = vcombine.high %v416, %v416
    %v425 = vcombine.high %v362, %v362
    %v427 = vunpack.c.l.s4 1983009808
    %v428 = vunpack.c.0.s8 %v427
    %v429 = vlaneseq
    %v430 = vshrl.u32 %v429, 7
    %v431 = vsub.s32 %v428, %v430
    %v432 = vrot.slane %v362, %v431
    %v434 = vunpack.c.l.s4 1983009808
    %v435 = vunpack.c.0.s8 %v434
    %v436 = vlaneseq
    %v437 = vshrl.u32 %v436, 7
    %v438 = vsub.s32 %v435, %v437
    %v439 = vrot.slane %v425, %v438
    %v440 = vcombine.high %v432, %v432
    %v441 = vcombine.high %v439, %v439
    %v442 = vcombine.high %v363, %v363
    %v444 = vunpack.c.l.s4 1983009808
    %v445 = vunpack.c.0.s8 %v444
    %v446 = vlaneseq
    %v447 = vshrl.u32 %v446, 7
    %v448 = vsub.s32 %v445, %v447
    %v449 = vrot.slane %v363, %v448
    %v451 = vunpack.c.l.s4 1983009808
    %v452 = vunpack.c.0.s8 %v451
    %v453 = vlaneseq
    %v454 = vshrl.u32 %v453, 7
    %v455 = vsub.s32 %v452, %v454
    %v456 = vrot.slane %v442, %v455
    %v457 = vcombine.high %v449, %v449
    %v458 = vcombine.high %v364, %v364
    %v460 = vunpack.c.l.s4 1983009808
    %v461 = vunpack.c.0.s8 %v460
    %v462 = vlaneseq
    %v463 = vshrl.u32 %v462, 7
    %v464 = vsub.s32 %v461, %v463
    %v465 = vrot.slane %v364, %v464
    %v467 = vunpack.c.l.s4 1983009808
    %v468 = vunpack.c.0.s8 %v467
    %v469 = vlaneseq
    %v470 = vshrl.u32 %v469, 7
    %v471 = vsub.s32 %v468, %v470
    %v472 = vrot.slane %v458, %v471
    %v473 = vcombine.high %v465, %v465
    %v474 = vcombine.high %v472, %v472
    %v475 = vcombine.high %v365, %v365
    %v477 = vunpack.c.l.s4 1983009808
    %v478 = vunpack.c.0.s8 %v477
    %v479 = vlaneseq
    %v480 = vshrl.u32 %v479, 7
    %v481 = vsub.s32 %v478, %v480
    %v482 = vrot.slane %v365, %v481
    %v484 = vunpack.c.l.s4 1983009808
    %v485 = vunpack.c.0.s8 %v484
    %v486 = vlaneseq
    %v487 = vshrl.u32 %v486, 7
    %v488 = vsub.s32 %v485, %v487
    %v489 = vrot.slane %v475, %v488
    %v490 = vcombine.high %v482, %v482
    %v491 = vcombine.high %v366, %v366
    %v493 = vunpack.c.l.s4 1983009808
    %v494 = vunpack.c.0.s8 %v493
    %v495 = vlaneseq
    %v496 = vshrl.u32 %v495, 7
    %v497 = vsub.s32 %v494, %v496
    %v498 = vrot.slane %v366, %v497
    %v500 = vunpack.c.l.s4 1983009808
    %v501 = vunpack.c.0.s8 %v500
    %v502 = vlaneseq
    %v503 = vshrl.u32 %v502, 7
    %v504 = vsub.s32 %v501, %v503
    %v505 = vrot.slane %v491, %v504
    %v506 = vcombine.high %v498, %v498
    %v507 = vcombine.high %v505, %v505
    %v508 = vcombine.high %v367, %v367
    %v510 = vunpack.c.l.s4 1983009808
    %v511 = vunpack.c.0.s8 %v510
    %v512 = vlaneseq
    %v513 = vshrl.u32 %v512, 7
    %v514 = vsub.s32 %v511, %v513
    %v515 = vrot.slane %v367, %v514
    %v517 = vunpack.c.l.s4 1983009808
    %v518 = vunpack.c.0.s8 %v517
    %v519 = vlaneseq
    %v520 = vshrl.u32 %v519, 7
    %v521 = vsub.s32 %v518, %v520
    %v522 = vrot.slane %v508, %v521
    %v523 = vcombine.high %v515, %v515
    %v524 = vcombine.high %v368, %v368
    %v526 = vunpack.c.l.s4 1983009808
    %v527 = vunpack.c.0.s8 %v526
    %v528 = vlaneseq
    %v529 = vshrl.u32 %v528, 7
    %v530 = vsub.s32 %v527, %v529
    %v531 = vrot.slane %v368, %v530
    %v533 = vunpack.c.l.s4 1983009808
    %v534 = vunpack.c.0.s8 %v533
    %v535 = vlaneseq
    %v536 = vshrl.u32 %v535, 7
    %v537 = vsub.s32 %v534, %v536
    %v538 = vrot.slane %v524, %v537
    %v539 = vcombine.high %v531, %v531
    %v540 = vcombine.high %v538, %v538
    %v541 = vcombine.high %v369, %v369
    %v543 = vunpack.c.l.s4 1983009808
    %v544 = vunpack.c.0.s8 %v543
    %v545 = vlaneseq
    %v546 = vshrl.u32 %v545, 7
    %v547 = vsub.s32 %v544, %v546
    %v548 = vrot.slane %v369, %v547
    %v550 = vunpack.c.l.s4 1983009808
    %v551 = vunpack.c.0.s8 %v550
    %v552 = vlaneseq
    %v553 = vshrl.u32 %v552, 7
    %v554 = vsub.s32 %v551, %v553
    %v555 = vrot.slane %v541, %v554
    %v556 = vcombine.high %v548, %v548
    %v557 = vcombine.high %v370, %v370
    %v559 = vunpack.c.l.s4 1983009808
    %v560 = vunpack.c.0.s8 %v559
    %v561 = vlaneseq
    %v562 = vshrl.u32 %v561, 7
    %v563 = vsub.s32 %v560, %v562
    %v564 = vrot.slane %v370, %v563
    %v566 = vunpack.c.l.s4 1983009808
    %v567 = vunpack.c.0.s8 %v566
    %v568 = vlaneseq
    %v569 = vshrl.u32 %v568, 7
    %v570 = vsub.s32 %v567, %v569
    %v571 = vrot.slane %v557, %v570
    %v572 = vcombine.high %v564, %v564
    %v573 = vcombine.high %v571, %v571
    %v574 = vcombine.high %v371, %v371
    %v576 = vunpack.c.l.s4 1983009808
    %v577 = vunpack.c.0.s8 %v576
    %v578 = vlaneseq
    %v579 = vshrl.u32 %v578, 7
    %v580 = vsub.s32 %v577, %v579
    %v581 = vrot.slane %v371, %v580
    %v583 = vunpack.c.l.s4 1983009808
    %v584 = vunpack.c.0.s8 %v583
    %v585 = vlaneseq
    %v586 = vshrl.u32 %v585, 7
    %v587 = vsub.s32 %v584, %v586
    %v588 = vrot.slane %v574, %v587
    %v589 = vcombine.high %v581, %v581
    %v590 = vcombine.high %v372, %v372
    %v592 = vunpack.c.l.s4 1983009808
    %v593 = vunpack.c.0.s8 %v592
    %v594 = vlaneseq
    %v595 = vshrl.u32 %v594, 7
    %v596 = vsub.s32 %v593, %v595
    %v597 = vrot.slane %v372, %v596
    %v599 = vunpack.c.l.s4 1983009808
    %v600 = vunpack.c.0.s8 %v599
    %v601 = vlaneseq
    %v602 = vshrl.u32 %v601, 7
    %v603 = vsub.s32 %v600, %v602
    %v604 = vrot.slane %v590, %v603
    %v605 = vcombine.high %v597, %v597
    %v606 = vcombine.high %v604, %v604
    %v607 = vcombine.high %v373, %v373
    %v609 = vunpack.c.l.s4 1983009808
    %v610 = vunpack.c.0.s8 %v609
    %v611 = vlaneseq
    %v612 = vshrl.u32 %v611, 7
    %v613 = vsub.s32 %v610, %v612
    %v614 = vrot.slane %v373, %v613
    %v616 = vunpack.c.l.s4 1983009808
    %v617 = vunpack.c.0.s8 %v616
    %v618 = vlaneseq
    %v619 = vshrl.u32 %v618, 7
    %v620 = vsub.s32 %v617, %v619
    %v621 = vrot.slane %v607, %v620
    %v622 = vcombine.high %v614, %v614
    %v623 = vcombine.high %v374, %v374
    %v625 = vunpack.c.l.s4 1983009808
    %v626 = vunpack.c.0.s8 %v625
    %v627 = vlaneseq
    %v628 = vshrl.u32 %v627, 7
    %v629 = vsub.s32 %v626, %v628
    %v630 = vrot.slane %v374, %v629
    %v632 = vunpack.c.l.s4 1983009808
    %v633 = vunpack.c.0.s8 %v632
    %v634 = vlaneseq
    %v635 = vshrl.u32 %v634, 7
    %v636 = vsub.s32 %v633, %v635
    %v637 = vrot.slane %v623, %v636
    %v638 = vcombine.high %v630, %v630
    %v639 = vcombine.high %v637, %v637
    %v640 = vcombine.high %v375, %v375
    %v642 = vunpack.c.l.s4 1983009808
    %v643 = vunpack.c.0.s8 %v642
    %v644 = vlaneseq
    %v645 = vshrl.u32 %v644, 7
    %v646 = vsub.s32 %v643, %v645
    %v647 = vrot.slane %v375, %v646
    %v649 = vunpack.c.l.s4 1983009808
    %v650 = vunpack.c.0.s8 %v649
    %v651 = vlaneseq
    %v652 = vshrl.u32 %v651, 7
    %v653 = vsub.s32 %v650, %v652
    %v654 = vrot.slane %v640, %v653
    %v655 = vcombine.high %v647, %v647
    %v712 = vrot.slane %v399, 7
    %v713 = vrot.slane %v712, 2
    %v714 = vrot.slane %v407, 7
    %v715 = vrot.slane %v714, 2
    %v716 = vrot.slane %v406, 7
    %v717 = vrot.slane %v716, 2
    %v718 = vrot.slane %v408, 7
    %v719 = vrot.slane %v718, 2
    %v720 = vrot.slane %v416, 7
    %v721 = vrot.slane %v720, 2
    %v722 = vrot.slane %v424, 7
    %v723 = vrot.slane %v722, 2
    %v724 = vrot.slane %v423, 7
    %v725 = vrot.slane %v724, 2
    %v726 = vrot.slane %v432, 7
    %v727 = vrot.slane %v726, 2
    %v728 = vrot.slane %v440, 7
    %v729 = vrot.slane %v728, 2
    %v730 = vrot.slane %v439, 7
    %v731 = vrot.slane %v730, 2
    %v732 = vrot.slane %v441, 7
    %v733 = vrot.slane %v732, 2
    %v734 = vrot.slane %v449, 7
    %v735 = vrot.slane %v734, 2
    %v736 = vrot.slane %v457, 7
    %v737 = vrot.slane %v736, 2
    %v738 = vrot.slane %v456, 7
    %v739 = vrot.slane %v738, 2
    %v740 = vrot.slane %v465, 7
    %v741 = vrot.slane %v740, 2
    %v742 = vrot.slane %v473, 7
    %v743 = vrot.slane %v742, 2
    %v744 = vrot.slane %v472, 7
    %v745 = vrot.slane %v744, 2
    %v746 = vrot.slane %v474, 7
    %v747 = vrot.slane %v746, 2
    %v748 = vrot.slane %v482, 7
    %v749 = vrot.slane %v748, 2
    %v750 = vrot.slane %v490, 7
    %v751 = vrot.slane %v750, 2
    %v752 = vrot.slane %v489, 7
    %v753 = vrot.slane %v752, 2
    %v754 = vrot.slane %v498, 7
    %v755 = vrot.slane %v754, 2
    %v756 = vrot.slane %v506, 7
    %v757 = vrot.slane %v756, 2
    %v758 = vrot.slane %v505, 7
    %v759 = vrot.slane %v758, 2
    %v760 = vrot.slane %v507, 7
    %v761 = vrot.slane %v760, 2
    %v762 = vrot.slane %v515, 7
    %v763 = vrot.slane %v762, 2
    %v764 = vrot.slane %v523, 7
    %v765 = vrot.slane %v764, 2
    %v766 = vrot.slane %v522, 7
    %v767 = vrot.slane %v766, 2
    %v768 = vrot.slane %v531, 7
    %v769 = vrot.slane %v768, 2
    %v770 = vrot.slane %v539, 7
    %v771 = vrot.slane %v770, 2
    %v772 = vrot.slane %v538, 7
    %v773 = vrot.slane %v772, 2
    %v774 = vrot.slane %v540, 7
    %v775 = vrot.slane %v774, 2
    %v776 = vrot.slane %v548, 7
    %v777 = vrot.slane %v776, 2
    %v778 = vrot.slane %v556, 7
    %v779 = vrot.slane %v778, 2
    %v780 = vrot.slane %v555, 7
    %v781 = vrot.slane %v780, 2
    %v782 = vrot.slane %v564, 7
    %v783 = vrot.slane %v782, 2
    %v784 = vrot.slane %v572, 7
    %v785 = vrot.slane %v784, 2
    %v786 = vrot.slane %v571, 7
    %v787 = vrot.slane %v786, 2
    %v788 = vrot.slane %v573, 7
    %v789 = vrot.slane %v788, 2
    %v790 = vrot.slane %v581, 7
    %v791 = vrot.slane %v790, 2
    %v792 = vrot.slane %v589, 7
    %v793 = vrot.slane %v792, 2
    %v794 = vrot.slane %v588, 7
    %v795 = vrot.slane %v794, 2
    %v796 = vrot.slane %v597, 7
    %v797 = vrot.slane %v796, 2
    %v798 = vrot.slane %v605, 7
    %v799 = vrot.slane %v798, 2
    %v800 = vrot.slane %v604, 7
    %v801 = vrot.slane %v800, 2
    %v802 = vrot.slane %v606, 7
    %v803 = vrot.slane %v802, 2
    %v804 = vrot.slane %v614, 7
    %v805 = vrot.slane %v804, 2
    %v806 = vrot.slane %v622, 7
    %v807 = vrot.slane %v806, 2
    %v808 = vrot.slane %v621, 7
    %v809 = vrot.slane %v808, 2
    %v810 = vrot.slane %v630, 7
    %v811 = vrot.slane %v810, 2
    %v812 = vrot.slane %v638, 7
    %v813 = vrot.slane %v812, 2
    %v814 = vrot.slane %v637, 7
    %v815 = vrot.slane %v814, 2
    %v816 = vrot.slane %v639, 7
    %v817 = vrot.slane %v816, 2
    %v818 = vrot.slane %v647, 7
    %v819 = vrot.slane %v818, 2
    %v820 = vrot.slane %v655, 7
    %v821 = vrot.slane %v820, 2
    %v822 = vrot.slane %v654, 7
    %v823 = vrot.slane %v822, 2
    %v880 = vmax.f32 %v399, %v713
    %v881 = vmax.f32 %v407, %v715
    %v882 = vmax.f32 %v406, %v717
    %v883 = vmax.f32 %v408, %v719
    %v884 = vmax.f32 %v416, %v721
    %v885 = vmax.f32 %v424, %v723
    %v886 = vmax.f32 %v423, %v725
    %v887 = vmax.f32 %v432, %v727
    %v888 = vmax.f32 %v440, %v729
    %v889 = vmax.f32 %v439, %v731
    %v890 = vmax.f32 %v441, %v733
    %v891 = vmax.f32 %v449, %v735
    %v892 = vmax.f32 %v457, %v737
    %v893 = vmax.f32 %v456, %v739
    %v894 = vmax.f32 %v465, %v741
    %v895 = vmax.f32 %v473, %v743
    %v896 = vmax.f32 %v472, %v745
    %v897 = vmax.f32 %v474, %v747
    %v898 = vmax.f32 %v482, %v749
    %v899 = vmax.f32 %v490, %v751
    %v900 = vmax.f32 %v489, %v753
    %v901 = vmax.f32 %v498, %v755
    %v902 = vmax.f32 %v506, %v757
    %v903 = vmax.f32 %v505, %v759
    %v904 = vmax.f32 %v507, %v761
    %v905 = vmax.f32 %v515, %v763
    %v906 = vmax.f32 %v523, %v765
    %v907 = vmax.f32 %v522, %v767
    %v908 = vmax.f32 %v531, %v769
    %v909 = vmax.f32 %v539, %v771
    %v910 = vmax.f32 %v538, %v773
    %v911 = vmax.f32 %v540, %v775
    %v912 = vmax.f32 %v548, %v777
    %v913 = vmax.f32 %v556, %v779
    %v914 = vmax.f32 %v555, %v781
    %v915 = vmax.f32 %v564, %v783
    %v916 = vmax.f32 %v572, %v785
    %v917 = vmax.f32 %v571, %v787
    %v918 = vmax.f32 %v573, %v789
    %v919 = vmax.f32 %v581, %v791
    %v920 = vmax.f32 %v589, %v793
    %v921 = vmax.f32 %v588, %v795
    %v922 = vmax.f32 %v597, %v797
    %v923 = vmax.f32 %v605, %v799
    %v924 = vmax.f32 %v604, %v801
    %v925 = vmax.f32 %v606, %v803
    %v926 = vmax.f32 %v614, %v805
    %v927 = vmax.f32 %v622, %v807
    %v928 = vmax.f32 %v621, %v809
    %v929 = vmax.f32 %v630, %v811
    %v930 = vmax.f32 %v638, %v813
    %v931 = vmax.f32 %v637, %v815
    %v932 = vmax.f32 %v639, %v817
    %v933 = vmax.f32 %v647, %v819
    %v934 = vmax.f32 %v655, %v821
    %v935 = vmax.f32 %v654, %v823
    %v976 = vlaneseq
    %v977 = vshrl.u32 %v976, 7
    %v978 = vsub.s32 0, %v977
    %v979 = vrot.slane %v880, %v978
    %v980 = vlaneseq
    %v981 = vshrl.u32 %v980, 7
    %v982 = vsub.s32 0, %v981
    %v983 = vrot.slane %v881, %v982
    %v984 = vlaneseq
    %v985 = vshrl.u32 %v984, 7
    %v986 = vsub.s32 0, %v985
    %v987 = vrot.slane %v882, %v986
    %v988 = vlaneseq
    %v989 = vshrl.u32 %v988, 7
    %v990 = vsub.s32 0, %v989
    %v991 = vrot.slane %v883, %v990
    %v992 = vlaneseq
    %v993 = vshrl.u32 %v992, 7
    %v994 = vsub.s32 0, %v993
    %v995 = vrot.slane %v884, %v994
    %v996 = vlaneseq
    %v997 = vshrl.u32 %v996, 7
    %v998 = vsub.s32 0, %v997
    %v999 = vrot.slane %v887, %v998
    %v1000 = vlaneseq
    %v1001 = vshrl.u32 %v1000, 7
    %v1002 = vsub.s32 0, %v1001
    %v1003 = vrot.slane %v888, %v1002
    %v1004 = vlaneseq
    %v1005 = vshrl.u32 %v1004, 7
    %v1006 = vsub.s32 0, %v1005
    %v1007 = vrot.slane %v889, %v1006
    %v1008 = vlaneseq
    %v1009 = vshrl.u32 %v1008, 7
    %v1010 = vsub.s32 0, %v1009
    %v1011 = vrot.slane %v890, %v1010
    %v1012 = vlaneseq
    %v1013 = vshrl.u32 %v1012, 7
    %v1014 = vsub.s32 0, %v1013
    %v1015 = vrot.slane %v891, %v1014
    %v1016 = vlaneseq
    %v1017 = vshrl.u32 %v1016, 7
    %v1018 = vsub.s32 0, %v1017
    %v1019 = vrot.slane %v894, %v1018
    %v1020 = vlaneseq
    %v1021 = vshrl.u32 %v1020, 7
    %v1022 = vsub.s32 0, %v1021
    %v1023 = vrot.slane %v895, %v1022
    %v1024 = vlaneseq
    %v1025 = vshrl.u32 %v1024, 7
    %v1026 = vsub.s32 0, %v1025
    %v1027 = vrot.slane %v896, %v1026
    %v1028 = vlaneseq
    %v1029 = vshrl.u32 %v1028, 7
    %v1030 = vsub.s32 0, %v1029
    %v1031 = vrot.slane %v897, %v1030
    %v1032 = vlaneseq
    %v1033 = vshrl.u32 %v1032, 7
    %v1034 = vsub.s32 0, %v1033
    %v1035 = vrot.slane %v898, %v1034
    %v1036 = vlaneseq
    %v1037 = vshrl.u32 %v1036, 7
    %v1038 = vsub.s32 0, %v1037
    %v1039 = vrot.slane %v901, %v1038
    %v1040 = vlaneseq
    %v1041 = vshrl.u32 %v1040, 7
    %v1042 = vsub.s32 0, %v1041
    %v1043 = vrot.slane %v902, %v1042
    %v1044 = vlaneseq
    %v1045 = vshrl.u32 %v1044, 7
    %v1046 = vsub.s32 0, %v1045
    %v1047 = vrot.slane %v903, %v1046
    %v1048 = vlaneseq
    %v1049 = vshrl.u32 %v1048, 7
    %v1050 = vsub.s32 0, %v1049
    %v1051 = vrot.slane %v904, %v1050
    %v1052 = vlaneseq
    %v1053 = vshrl.u32 %v1052, 7
    %v1054 = vsub.s32 0, %v1053
    %v1055 = vrot.slane %v905, %v1054
    %v1056 = vlaneseq
    %v1057 = vshrl.u32 %v1056, 7
    %v1058 = vsub.s32 0, %v1057
    %v1059 = vrot.slane %v908, %v1058
    %v1060 = vlaneseq
    %v1061 = vshrl.u32 %v1060, 7
    %v1062 = vsub.s32 0, %v1061
    %v1063 = vrot.slane %v909, %v1062
    %v1064 = vlaneseq
    %v1065 = vshrl.u32 %v1064, 7
    %v1066 = vsub.s32 0, %v1065
    %v1067 = vrot.slane %v910, %v1066
    %v1068 = vlaneseq
    %v1069 = vshrl.u32 %v1068, 7
    %v1070 = vsub.s32 0, %v1069
    %v1071 = vrot.slane %v911, %v1070
    %v1072 = vlaneseq
    %v1073 = vshrl.u32 %v1072, 7
    %v1074 = vsub.s32 0, %v1073
    %v1075 = vrot.slane %v912, %v1074
    %v1076 = vlaneseq
    %v1077 = vshrl.u32 %v1076, 7
    %v1078 = vsub.s32 0, %v1077
    %v1079 = vrot.slane %v915, %v1078
    %v1080 = vlaneseq
    %v1081 = vshrl.u32 %v1080, 7
    %v1082 = vsub.s32 0, %v1081
    %v1083 = vrot.slane %v916, %v1082
    %v1084 = vlaneseq
    %v1085 = vshrl.u32 %v1084, 7
    %v1086 = vsub.s32 0, %v1085
    %v1087 = vrot.slane %v917, %v1086
    %v1088 = vlaneseq
    %v1089 = vshrl.u32 %v1088, 7
    %v1090 = vsub.s32 0, %v1089
    %v1091 = vrot.slane %v918, %v1090
    %v1092 = vlaneseq
    %v1093 = vshrl.u32 %v1092, 7
    %v1094 = vsub.s32 0, %v1093
    %v1095 = vrot.slane %v919, %v1094
    %v1096 = vlaneseq
    %v1097 = vshrl.u32 %v1096, 7
    %v1098 = vsub.s32 0, %v1097
    %v1099 = vrot.slane %v922, %v1098
    %v1100 = vlaneseq
    %v1101 = vshrl.u32 %v1100, 7
    %v1102 = vsub.s32 0, %v1101
    %v1103 = vrot.slane %v923, %v1102
    %v1104 = vlaneseq
    %v1105 = vshrl.u32 %v1104, 7
    %v1106 = vsub.s32 0, %v1105
    %v1107 = vrot.slane %v924, %v1106
    %v1108 = vlaneseq
    %v1109 = vshrl.u32 %v1108, 7
    %v1110 = vsub.s32 0, %v1109
    %v1111 = vrot.slane %v925, %v1110
    %v1112 = vlaneseq
    %v1113 = vshrl.u32 %v1112, 7
    %v1114 = vsub.s32 0, %v1113
    %v1115 = vrot.slane %v926, %v1114
    %v1116 = vlaneseq
    %v1117 = vshrl.u32 %v1116, 7
    %v1118 = vsub.s32 0, %v1117
    %v1119 = vrot.slane %v929, %v1118
    %v1120 = vlaneseq
    %v1121 = vshrl.u32 %v1120, 7
    %v1122 = vsub.s32 0, %v1121
    %v1123 = vrot.slane %v930, %v1122
    %v1124 = vlaneseq
    %v1125 = vshrl.u32 %v1124, 7
    %v1126 = vsub.s32 0, %v1125
    %v1127 = vrot.slane %v931, %v1126
    %v1128 = vlaneseq
    %v1129 = vshrl.u32 %v1128, 7
    %v1130 = vsub.s32 0, %v1129
    %v1131 = vrot.slane %v932, %v1130
    %v1132 = vlaneseq
    %v1133 = vshrl.u32 %v1132, 7
    %v1134 = vsub.s32 0, %v1133
    %v1135 = vrot.slane %v933, %v1134
    %vm1136 = vcmask 1041409
    %v1137 = vsel %vm1136, %v983, %v979
    %vm1138 = vcmask 1042434
    %v1139 = vsel %vm1138, %v987, %v1137
    %vm1140 = vcmask 1043459
    %v1141 = vsel %vm1140, %v991, %v1139
    %vm1142 = vcmask 1044484
    %v1143 = vsel %vm1142, %v995, %v1141
    %v1144 = vsel %vm1136, %v1003, %v999
    %v1145 = vsel %vm1138, %v1007, %v1144
    %v1146 = vsel %vm1140, %v1011, %v1145
    %v1147 = vsel %vm1142, %v1015, %v1146
    %v1148 = vsel %vm1136, %v1023, %v1019
    %v1149 = vsel %vm1138, %v1027, %v1148
    %v1150 = vsel %vm1140, %v1031, %v1149
    %v1151 = vsel %vm1142, %v1035, %v1150
    %v1152 = vsel %vm1136, %v1043, %v1039
    %v1153 = vsel %vm1138, %v1047, %v1152
    %v1154 = vsel %vm1140, %v1051, %v1153
    %v1155 = vsel %vm1142, %v1055, %v1154
    %v1156 = vsel %vm1136, %v1063, %v1059
    %v1157 = vsel %vm1138, %v1067, %v1156
    %v1158 = vsel %vm1140, %v1071, %v1157
    %v1159 = vsel %vm1142, %v1075, %v1158
    %v1160 = vsel %vm1136, %v1083, %v1079
    %v1161 = vsel %vm1138, %v1087, %v1160
    %v1162 = vsel %vm1140, %v1091, %v1161
    %v1163 = vsel %vm1142, %v1095, %v1162
    %v1164 = vsel %vm1136, %v1103, %v1099
    %v1165 = vsel %vm1138, %v1107, %v1164
    %v1166 = vsel %vm1140, %v1111, %v1165
    %v1167 = vsel %vm1142, %v1115, %v1166
    %v1168 = vsel %vm1136, %v1123, %v1119
    %v1169 = vsel %vm1138, %v1127, %v1168
    %v1170 = vsel %vm1140, %v1131, %v1169
    %v1171 = vsel %vm1142, %v1135, %v1170
    %v1188 = vlaneseq
    %v1189 = vshrl.u32 %v1188, 7
    %v1190 = vsub.s32 0, %v1189
    %v1191 = vrot.slane %v885, %v1190
    %v1192 = vlaneseq
    %v1193 = vshrl.u32 %v1192, 7
    %v1194 = vsub.s32 0, %v1193
    %v1195 = vrot.slane %v892, %v1194
    %v1196 = vlaneseq
    %v1197 = vshrl.u32 %v1196, 7
    %v1198 = vsub.s32 0, %v1197
    %v1199 = vrot.slane %v899, %v1198
    %v1200 = vlaneseq
    %v1201 = vshrl.u32 %v1200, 7
    %v1202 = vsub.s32 0, %v1201
    %v1203 = vrot.slane %v906, %v1202
    %v1204 = vlaneseq
    %v1205 = vshrl.u32 %v1204, 7
    %v1206 = vsub.s32 0, %v1205
    %v1207 = vrot.slane %v913, %v1206
    %v1208 = vlaneseq
    %v1209 = vshrl.u32 %v1208, 7
    %v1210 = vsub.s32 0, %v1209
    %v1211 = vrot.slane %v920, %v1210
    %v1212 = vlaneseq
    %v1213 = vshrl.u32 %v1212, 7
    %v1214 = vsub.s32 0, %v1213
    %v1215 = vrot.slane %v927, %v1214
    %v1216 = vlaneseq
    %v1217 = vshrl.u32 %v1216, 7
    %v1218 = vsub.s32 0, %v1217
    %v1219 = vrot.slane %v934, %v1218
    %v1220 = vsel %vm1136, %v987, %v983
    %v1221 = vsel %vm1138, %v991, %v1220
    %v1222 = vsel %vm1140, %v995, %v1221
    %v1223 = vsel %vm1142, %v1191, %v1222
    %v1224 = vsel %vm1136, %v1007, %v1003
    %v1225 = vsel %vm1138, %v1011, %v1224
    %v1226 = vsel %vm1140, %v1015, %v1225
    %v1227 = vsel %vm1142, %v1195, %v1226
    %v1228 = vsel %vm1136, %v1027, %v1023
    %v1229 = vsel %vm1138, %v1031, %v1228
    %v1230 = vsel %vm1140, %v1035, %v1229
    %v1231 = vsel %vm1142, %v1199, %v1230
    %v1232 = vsel %vm1136, %v1047, %v1043
    %v1233 = vsel %vm1138, %v1051, %v1232
    %v1234 = vsel %vm1140, %v1055, %v1233
    %v1235 = vsel %vm1142, %v1203, %v1234
    %v1236 = vsel %vm1136, %v1067, %v1063
    %v1237 = vsel %vm1138, %v1071, %v1236
    %v1238 = vsel %vm1140, %v1075, %v1237
    %v1239 = vsel %vm1142, %v1207, %v1238
    %v1240 = vsel %vm1136, %v1087, %v1083
    %v1241 = vsel %vm1138, %v1091, %v1240
    %v1242 = vsel %vm1140, %v1095, %v1241
    %v1243 = vsel %vm1142, %v1211, %v1242
    %v1244 = vsel %vm1136, %v1107, %v1103
    %v1245 = vsel %vm1138, %v1111, %v1244
    %v1246 = vsel %vm1140, %v1115, %v1245
    %v1247 = vsel %vm1142, %v1215, %v1246
    %v1248 = vsel %vm1136, %v1127, %v1123
    %v1249 = vsel %vm1138, %v1131, %v1248
    %v1250 = vsel %vm1140, %v1135, %v1249
    %v1251 = vsel %vm1142, %v1219, %v1250
    %1252 = vrot.lane.b32.xlu0 %v1223, 15
    %v1253 = vpop.permute.xlu0 %1252
    %1254 = vrot.lane.b32.xlu0 %v1227, 15
    %v1255 = vpop.permute.xlu0 %1254
    %1256 = vrot.lane.b32.xlu0 %v1231, 15
    %v1257 = vpop.permute.xlu0 %1256
    %1258 = vrot.lane.b32.xlu0 %v1235, 15
    %v1259 = vpop.permute.xlu0 %1258
    %1260 = vrot.lane.b32.xlu0 %v1239, 15
    %v1261 = vpop.permute.xlu0 %1260
    %1262 = vrot.lane.b32.xlu0 %v1243, 15
    %v1263 = vpop.permute.xlu0 %1262
    %1264 = vrot.lane.b32.xlu0 %v1247, 15
    %v1265 = vpop.permute.xlu0 %1264
    %1266 = vrot.lane.b32.xlu0 %v1251, 15
    %v1267 = vpop.permute.xlu0 %1266
    %v1284 = vlaneseq
    %v1285 = vshrl.u32 %v1284, 7
    %v1286 = vsub.s32 0, %v1285
    %v1287 = vrot.slane %v886, %v1286
    %v1288 = vlaneseq
    %v1289 = vshrl.u32 %v1288, 7
    %v1290 = vsub.s32 0, %v1289
    %v1291 = vrot.slane %v893, %v1290
    %v1292 = vlaneseq
    %v1293 = vshrl.u32 %v1292, 7
    %v1294 = vsub.s32 0, %v1293
    %v1295 = vrot.slane %v900, %v1294
    %v1296 = vlaneseq
    %v1297 = vshrl.u32 %v1296, 7
    %v1298 = vsub.s32 0, %v1297
    %v1299 = vrot.slane %v907, %v1298
    %v1300 = vlaneseq
    %v1301 = vshrl.u32 %v1300, 7
    %v1302 = vsub.s32 0, %v1301
    %v1303 = vrot.slane %v914, %v1302
    %v1304 = vlaneseq
    %v1305 = vshrl.u32 %v1304, 7
    %v1306 = vsub.s32 0, %v1305
    %v1307 = vrot.slane %v921, %v1306
    %v1308 = vlaneseq
    %v1309 = vshrl.u32 %v1308, 7
    %v1310 = vsub.s32 0, %v1309
    %v1311 = vrot.slane %v928, %v1310
    %v1312 = vlaneseq
    %v1313 = vshrl.u32 %v1312, 7
    %v1314 = vsub.s32 0, %v1313
    %v1315 = vrot.slane %v935, %v1314
    %v1316 = vsel %vm1136, %v991, %v987
    %v1317 = vsel %vm1138, %v995, %v1316
    %v1318 = vsel %vm1140, %v1191, %v1317
    %v1319 = vsel %vm1142, %v1287, %v1318
    %v1320 = vsel %vm1136, %v1011, %v1007
    %v1321 = vsel %vm1138, %v1015, %v1320
    %v1322 = vsel %vm1140, %v1195, %v1321
    %v1323 = vsel %vm1142, %v1291, %v1322
    %v1324 = vsel %vm1136, %v1031, %v1027
    %v1325 = vsel %vm1138, %v1035, %v1324
    %v1326 = vsel %vm1140, %v1199, %v1325
    %v1327 = vsel %vm1142, %v1295, %v1326
    %v1328 = vsel %vm1136, %v1051, %v1047
    %v1329 = vsel %vm1138, %v1055, %v1328
    %v1330 = vsel %vm1140, %v1203, %v1329
    %v1331 = vsel %vm1142, %v1299, %v1330
    %v1332 = vsel %vm1136, %v1071, %v1067
    %v1333 = vsel %vm1138, %v1075, %v1332
    %v1334 = vsel %vm1140, %v1207, %v1333
    %v1335 = vsel %vm1142, %v1303, %v1334
    %v1336 = vsel %vm1136, %v1091, %v1087
    %v1337 = vsel %vm1138, %v1095, %v1336
    %v1338 = vsel %vm1140, %v1211, %v1337
    %v1339 = vsel %vm1142, %v1307, %v1338
    %v1340 = vsel %vm1136, %v1111, %v1107
    %v1341 = vsel %vm1138, %v1115, %v1340
    %v1342 = vsel %vm1140, %v1215, %v1341
    %v1343 = vsel %vm1142, %v1311, %v1342
    %v1344 = vsel %vm1136, %v1131, %v1127
    %v1345 = vsel %vm1138, %v1135, %v1344
    %v1346 = vsel %vm1140, %v1219, %v1345
    %v1347 = vsel %vm1142, %v1315, %v1346
    %1348 = vrot.lane.b32.xlu0 %v1319, 30
    %v1349 = vpop.permute.xlu0 %1348
    %1350 = vrot.lane.b32.xlu0 %v1323, 30
    %v1351 = vpop.permute.xlu0 %1350
    %1352 = vrot.lane.b32.xlu0 %v1327, 30
    %v1353 = vpop.permute.xlu0 %1352
    %1354 = vrot.lane.b32.xlu0 %v1331, 30
    %v1355 = vpop.permute.xlu0 %1354
    %1356 = vrot.lane.b32.xlu0 %v1335, 30
    %v1357 = vpop.permute.xlu0 %1356
    %1358 = vrot.lane.b32.xlu0 %v1339, 30
    %v1359 = vpop.permute.xlu0 %1358
    %1360 = vrot.lane.b32.xlu0 %v1343, 30
    %v1361 = vpop.permute.xlu0 %1360
    %1362 = vrot.lane.b32.xlu0 %v1347, 30
    %v1363 = vpop.permute.xlu0 %1362
    %vm1372 = vcmask 121856
    %v1373 = vsel %vm1372, %v1143, %v1253
    %v1374 = vsel %vm1372, %v1147, %v1255
    %v1375 = vsel %vm1372, %v1151, %v1257
    %v1376 = vsel %vm1372, %v1155, %v1259
    %v1377 = vsel %vm1372, %v1159, %v1261
    %v1378 = vsel %vm1372, %v1163, %v1263
    %v1379 = vsel %vm1372, %v1167, %v1265
    %v1380 = vsel %vm1372, %v1171, %v1267
    %vm1381 = vcmask 244736
    %v1382 = vsel %vm1381, %v1373, %v1349
    %v1383 = vsel %vm1381, %v1374, %v1351
    %v1384 = vsel %vm1381, %v1375, %v1353
    %v1385 = vsel %vm1381, %v1376, %v1355
    %v1386 = vsel %vm1381, %v1377, %v1357
    %v1387 = vsel %vm1381, %v1378, %v1359
    %v1388 = vsel %vm1381, %v1379, %v1361
    %v1389 = vsel %vm1381, %v1380, %v1363
    %v1398 = vcombine.high %v1382, %v1382
    %v1400 = vunpack.c.l.s4 1966171168
    %v1401 = vunpack.c.0.s8 %v1400
    %v1402 = vlaneseq
    %v1403 = vshrl.u32 %v1402, 7
    %v1404 = vsub.s32 %v1401, %v1403
    %v1405 = vrot.slane %v1382, %v1404
    %v1407 = vunpack.c.l.s4 1966171168
    %v1408 = vunpack.c.0.s8 %v1407
    %v1409 = vlaneseq
    %v1410 = vshrl.u32 %v1409, 7
    %v1411 = vsub.s32 %v1408, %v1410
    %v1412 = vrot.slane %v1398, %v1411
    %v1413 = vcombine.high %v1405, %v1405
    %v1415 = vunpack.c.l.s4 1966171168
    %v1416 = vunpack.c.0.s8 %v1415
    %v1417 = vlaneseq
    %v1418 = vshrl.u32 %v1417, 7
    %v1419 = vsub.s32 %v1416, %v1418
    %v1420 = vrot.slane %v1405, %v1419
    %v1422 = vunpack.c.l.s4 1966171168
    %v1423 = vunpack.c.0.s8 %v1422
    %v1424 = vlaneseq
    %v1425 = vshrl.u32 %v1424, 7
    %v1426 = vsub.s32 %v1423, %v1425
    %v1427 = vrot.slane %v1412, %v1426
    %v1429 = vunpack.c.l.s4 1966171168
    %v1430 = vunpack.c.0.s8 %v1429
    %v1431 = vlaneseq
    %v1432 = vshrl.u32 %v1431, 7
    %v1433 = vsub.s32 %v1430, %v1432
    %v1434 = vrot.slane %v1413, %v1433
    %v1435 = vcombine.high %v1420, %v1420
    %v1436 = vcombine.high %v1434, %v1434
    %v1437 = vcombine.high %v1383, %v1383
    %v1439 = vunpack.c.l.s4 1966171168
    %v1440 = vunpack.c.0.s8 %v1439
    %v1441 = vlaneseq
    %v1442 = vshrl.u32 %v1441, 7
    %v1443 = vsub.s32 %v1440, %v1442
    %v1444 = vrot.slane %v1383, %v1443
    %v1446 = vunpack.c.l.s4 1966171168
    %v1447 = vunpack.c.0.s8 %v1446
    %v1448 = vlaneseq
    %v1449 = vshrl.u32 %v1448, 7
    %v1450 = vsub.s32 %v1447, %v1449
    %v1451 = vrot.slane %v1437, %v1450
    %v1452 = vcombine.high %v1444, %v1444
    %v1454 = vunpack.c.l.s4 1966171168
    %v1455 = vunpack.c.0.s8 %v1454
    %v1456 = vlaneseq
    %v1457 = vshrl.u32 %v1456, 7
    %v1458 = vsub.s32 %v1455, %v1457
    %v1459 = vrot.slane %v1444, %v1458
    %v1461 = vunpack.c.l.s4 1966171168
    %v1462 = vunpack.c.0.s8 %v1461
    %v1463 = vlaneseq
    %v1464 = vshrl.u32 %v1463, 7
    %v1465 = vsub.s32 %v1462, %v1464
    %v1466 = vrot.slane %v1451, %v1465
    %v1468 = vunpack.c.l.s4 1966171168
    %v1469 = vunpack.c.0.s8 %v1468
    %v1470 = vlaneseq
    %v1471 = vshrl.u32 %v1470, 7
    %v1472 = vsub.s32 %v1469, %v1471
    %v1473 = vrot.slane %v1452, %v1472
    %v1474 = vcombine.high %v1459, %v1459
    %v1475 = vcombine.high %v1473, %v1473
    %v1476 = vcombine.high %v1384, %v1384
    %v1478 = vunpack.c.l.s4 1966171168
    %v1479 = vunpack.c.0.s8 %v1478
    %v1480 = vlaneseq
    %v1481 = vshrl.u32 %v1480, 7
    %v1482 = vsub.s32 %v1479, %v1481
    %v1483 = vrot.slane %v1384, %v1482
    %v1485 = vunpack.c.l.s4 1966171168
    %v1486 = vunpack.c.0.s8 %v1485
    %v1487 = vlaneseq
    %v1488 = vshrl.u32 %v1487, 7
    %v1489 = vsub.s32 %v1486, %v1488
    %v1490 = vrot.slane %v1476, %v1489
    %v1491 = vcombine.high %v1483, %v1483
    %v1493 = vunpack.c.l.s4 1966171168
    %v1494 = vunpack.c.0.s8 %v1493
    %v1495 = vlaneseq
    %v1496 = vshrl.u32 %v1495, 7
    %v1497 = vsub.s32 %v1494, %v1496
    %v1498 = vrot.slane %v1483, %v1497
    %v1500 = vunpack.c.l.s4 1966171168
    %v1501 = vunpack.c.0.s8 %v1500
    %v1502 = vlaneseq
    %v1503 = vshrl.u32 %v1502, 7
    %v1504 = vsub.s32 %v1501, %v1503
    %v1505 = vrot.slane %v1490, %v1504
    %v1507 = vunpack.c.l.s4 1966171168
    %v1508 = vunpack.c.0.s8 %v1507
    %v1509 = vlaneseq
    %v1510 = vshrl.u32 %v1509, 7
    %v1511 = vsub.s32 %v1508, %v1510
    %v1512 = vrot.slane %v1491, %v1511
    %v1513 = vcombine.high %v1498, %v1498
    %v1514 = vcombine.high %v1512, %v1512
    %v1515 = vcombine.high %v1385, %v1385
    %v1517 = vunpack.c.l.s4 1966171168
    %v1518 = vunpack.c.0.s8 %v1517
    %v1519 = vlaneseq
    %v1520 = vshrl.u32 %v1519, 7
    %v1521 = vsub.s32 %v1518, %v1520
    %v1522 = vrot.slane %v1385, %v1521
    %v1524 = vunpack.c.l.s4 1966171168
    %v1525 = vunpack.c.0.s8 %v1524
    %v1526 = vlaneseq
    %v1527 = vshrl.u32 %v1526, 7
    %v1528 = vsub.s32 %v1525, %v1527
    %v1529 = vrot.slane %v1515, %v1528
    %v1530 = vcombine.high %v1522, %v1522
    %v1532 = vunpack.c.l.s4 1966171168
    %v1533 = vunpack.c.0.s8 %v1532
    %v1534 = vlaneseq
    %v1535 = vshrl.u32 %v1534, 7
    %v1536 = vsub.s32 %v1533, %v1535
    %v1537 = vrot.slane %v1522, %v1536
    %v1539 = vunpack.c.l.s4 1966171168
    %v1540 = vunpack.c.0.s8 %v1539
    %v1541 = vlaneseq
    %v1542 = vshrl.u32 %v1541, 7
    %v1543 = vsub.s32 %v1540, %v1542
    %v1544 = vrot.slane %v1529, %v1543
    %v1546 = vunpack.c.l.s4 1966171168
    %v1547 = vunpack.c.0.s8 %v1546
    %v1548 = vlaneseq
    %v1549 = vshrl.u32 %v1548, 7
    %v1550 = vsub.s32 %v1547, %v1549
    %v1551 = vrot.slane %v1530, %v1550
    %v1552 = vcombine.high %v1537, %v1537
    %v1553 = vcombine.high %v1551, %v1551
    %v1554 = vcombine.high %v1386, %v1386
    %v1556 = vunpack.c.l.s4 1966171168
    %v1557 = vunpack.c.0.s8 %v1556
    %v1558 = vlaneseq
    %v1559 = vshrl.u32 %v1558, 7
    %v1560 = vsub.s32 %v1557, %v1559
    %v1561 = vrot.slane %v1386, %v1560
    %v1563 = vunpack.c.l.s4 1966171168
    %v1564 = vunpack.c.0.s8 %v1563
    %v1565 = vlaneseq
    %v1566 = vshrl.u32 %v1565, 7
    %v1567 = vsub.s32 %v1564, %v1566
    %v1568 = vrot.slane %v1554, %v1567
    %v1569 = vcombine.high %v1561, %v1561
    %v1571 = vunpack.c.l.s4 1966171168
    %v1572 = vunpack.c.0.s8 %v1571
    %v1573 = vlaneseq
    %v1574 = vshrl.u32 %v1573, 7
    %v1575 = vsub.s32 %v1572, %v1574
    %v1576 = vrot.slane %v1561, %v1575
    %v1578 = vunpack.c.l.s4 1966171168
    %v1579 = vunpack.c.0.s8 %v1578
    %v1580 = vlaneseq
    %v1581 = vshrl.u32 %v1580, 7
    %v1582 = vsub.s32 %v1579, %v1581
    %v1583 = vrot.slane %v1568, %v1582
    %v1585 = vunpack.c.l.s4 1966171168
    %v1586 = vunpack.c.0.s8 %v1585
    %v1587 = vlaneseq
    %v1588 = vshrl.u32 %v1587, 7
    %v1589 = vsub.s32 %v1586, %v1588
    %v1590 = vrot.slane %v1569, %v1589
    %v1591 = vcombine.high %v1576, %v1576
    %v1592 = vcombine.high %v1590, %v1590
    %v1593 = vcombine.high %v1387, %v1387
    %v1595 = vunpack.c.l.s4 1966171168
    %v1596 = vunpack.c.0.s8 %v1595
    %v1597 = vlaneseq
    %v1598 = vshrl.u32 %v1597, 7
    %v1599 = vsub.s32 %v1596, %v1598
    %v1600 = vrot.slane %v1387, %v1599
    %v1602 = vunpack.c.l.s4 1966171168
    %v1603 = vunpack.c.0.s8 %v1602
    %v1604 = vlaneseq
    %v1605 = vshrl.u32 %v1604, 7
    %v1606 = vsub.s32 %v1603, %v1605
    %v1607 = vrot.slane %v1593, %v1606
    %v1608 = vcombine.high %v1600, %v1600
    %v1610 = vunpack.c.l.s4 1966171168
    %v1611 = vunpack.c.0.s8 %v1610
    %v1612 = vlaneseq
    %v1613 = vshrl.u32 %v1612, 7
    %v1614 = vsub.s32 %v1611, %v1613
    %v1615 = vrot.slane %v1600, %v1614
    %v1617 = vunpack.c.l.s4 1966171168
    %v1618 = vunpack.c.0.s8 %v1617
    %v1619 = vlaneseq
    %v1620 = vshrl.u32 %v1619, 7
    %v1621 = vsub.s32 %v1618, %v1620
    %v1622 = vrot.slane %v1607, %v1621
    %v1624 = vunpack.c.l.s4 1966171168
    %v1625 = vunpack.c.0.s8 %v1624
    %v1626 = vlaneseq
    %v1627 = vshrl.u32 %v1626, 7
    %v1628 = vsub.s32 %v1625, %v1627
    %v1629 = vrot.slane %v1608, %v1628
    %v1630 = vcombine.high %v1615, %v1615
    %v1631 = vcombine.high %v1629, %v1629
    %v1632 = vcombine.high %v1388, %v1388
    %v1634 = vunpack.c.l.s4 1966171168
    %v1635 = vunpack.c.0.s8 %v1634
    %v1636 = vlaneseq
    %v1637 = vshrl.u32 %v1636, 7
    %v1638 = vsub.s32 %v1635, %v1637
    %v1639 = vrot.slane %v1388, %v1638
    %v1641 = vunpack.c.l.s4 1966171168
    %v1642 = vunpack.c.0.s8 %v1641
    %v1643 = vlaneseq
    %v1644 = vshrl.u32 %v1643, 7
    %v1645 = vsub.s32 %v1642, %v1644
    %v1646 = vrot.slane %v1632, %v1645
    %v1647 = vcombine.high %v1639, %v1639
    %v1649 = vunpack.c.l.s4 1966171168
    %v1650 = vunpack.c.0.s8 %v1649
    %v1651 = vlaneseq
    %v1652 = vshrl.u32 %v1651, 7
    %v1653 = vsub.s32 %v1650, %v1652
    %v1654 = vrot.slane %v1639, %v1653
    %v1656 = vunpack.c.l.s4 1966171168
    %v1657 = vunpack.c.0.s8 %v1656
    %v1658 = vlaneseq
    %v1659 = vshrl.u32 %v1658, 7
    %v1660 = vsub.s32 %v1657, %v1659
    %v1661 = vrot.slane %v1646, %v1660
    %v1663 = vunpack.c.l.s4 1966171168
    %v1664 = vunpack.c.0.s8 %v1663
    %v1665 = vlaneseq
    %v1666 = vshrl.u32 %v1665, 7
    %v1667 = vsub.s32 %v1664, %v1666
    %v1668 = vrot.slane %v1647, %v1667
    %v1669 = vcombine.high %v1654, %v1654
    %v1670 = vcombine.high %v1668, %v1668
    %v1671 = vcombine.high %v1389, %v1389
    %v1673 = vunpack.c.l.s4 1966171168
    %v1674 = vunpack.c.0.s8 %v1673
    %v1675 = vlaneseq
    %v1676 = vshrl.u32 %v1675, 7
    %v1677 = vsub.s32 %v1674, %v1676
    %v1678 = vrot.slane %v1389, %v1677
    %v1680 = vunpack.c.l.s4 1966171168
    %v1681 = vunpack.c.0.s8 %v1680
    %v1682 = vlaneseq
    %v1683 = vshrl.u32 %v1682, 7
    %v1684 = vsub.s32 %v1681, %v1683
    %v1685 = vrot.slane %v1671, %v1684
    %v1686 = vcombine.high %v1678, %v1678
    %v1688 = vunpack.c.l.s4 1966171168
    %v1689 = vunpack.c.0.s8 %v1688
    %v1690 = vlaneseq
    %v1691 = vshrl.u32 %v1690, 7
    %v1692 = vsub.s32 %v1689, %v1691
    %v1693 = vrot.slane %v1678, %v1692
    %v1695 = vunpack.c.l.s4 1966171168
    %v1696 = vunpack.c.0.s8 %v1695
    %v1697 = vlaneseq
    %v1698 = vshrl.u32 %v1697, 7
    %v1699 = vsub.s32 %v1696, %v1698
    %v1700 = vrot.slane %v1685, %v1699
    %v1702 = vunpack.c.l.s4 1966171168
    %v1703 = vunpack.c.0.s8 %v1702
    %v1704 = vlaneseq
    %v1705 = vshrl.u32 %v1704, 7
    %v1706 = vsub.s32 %v1703, %v1705
    %v1707 = vrot.slane %v1686, %v1706
    %v1708 = vcombine.high %v1693, %v1693
    %v1709 = vcombine.high %v1707, %v1707
    %v1710 = vlaneseq
    %v1711 = vshrl.u32 %v1710, 7
    %v1712 = vsub.s32 0, %v1711
    %v1713 = vrot.slane %v34, %v1712
    %v1714 = vcombine.low %v1420, %v1434
    %v1715 = vcombine.low %v1435, %v1436
    %v1716 = vcombine.low %v1427, %v1459
    %v1717 = vcombine.low %v1473, %v1474
    %v1719 = vunpack.c.l.s4 1966171168
    %v1720 = vunpack.c.0.s8 %v1719
    %v1721 = vlaneseq
    %v1722 = vshrl.u32 %v1721, 7
    %v1723 = vsub.s32 %v1720, %v1722
    %v1724 = vrot.slane %v1714, %v1723
    %v1726 = vunpack.c.l.s4 1966171168
    %v1727 = vunpack.c.0.s8 %v1726
    %v1728 = vlaneseq
    %v1729 = vshrl.u32 %v1728, 7
    %v1730 = vsub.s32 %v1727, %v1729
    %v1731 = vrot.slane %v1715, %v1730
    %v1733 = vunpack.c.l.s4 1966171168
    %v1734 = vunpack.c.0.s8 %v1733
    %v1735 = vlaneseq
    %v1736 = vshrl.u32 %v1735, 7
    %v1737 = vsub.s32 %v1734, %v1736
    %v1738 = vrot.slane %v1716, %v1737
    %v1740 = vunpack.c.l.s4 1966171168
    %v1741 = vunpack.c.0.s8 %v1740
    %v1742 = vlaneseq
    %v1743 = vshrl.u32 %v1742, 7
    %v1744 = vsub.s32 %v1741, %v1743
    %v1745 = vrot.slane %v1717, %v1744
    %v1746 = vcombine.low %v1724, %v1731
    %v1747 = vcombine.low %v1738, %v1745
    %v1749 = vunpack.c.l.s4 1966171168
    %v1750 = vunpack.c.0.s8 %v1749
    %v1751 = vlaneseq
    %v1752 = vshrl.u32 %v1751, 7
    %v1753 = vsub.s32 %v1750, %v1752
    %v1754 = vrot.slane %v1746, %v1753
    %v1756 = vunpack.c.l.s4 1966171168
    %v1757 = vunpack.c.0.s8 %v1756
    %v1758 = vlaneseq
    %v1759 = vshrl.u32 %v1758, 7
    %v1760 = vsub.s32 %v1757, %v1759
    %v1761 = vrot.slane %v1747, %v1760
    %v1762 = vcombine.low %v1754, %v1761
    %v1763 = vcombine.low %v1475, %v1466
    %v1764 = vcombine.low %v1498, %v1512
    %v1765 = vcombine.low %v1513, %v1514
    %v1766 = vcombine.low %v1505, %v1537
    %v1768 = vunpack.c.l.s4 1966171168
    %v1769 = vunpack.c.0.s8 %v1768
    %v1770 = vlaneseq
    %v1771 = vshrl.u32 %v1770, 7
    %v1772 = vsub.s32 %v1769, %v1771
    %v1773 = vrot.slane %v1763, %v1772
    %v1775 = vunpack.c.l.s4 1966171168
    %v1776 = vunpack.c.0.s8 %v1775
    %v1777 = vlaneseq
    %v1778 = vshrl.u32 %v1777, 7
    %v1779 = vsub.s32 %v1776, %v1778
    %v1780 = vrot.slane %v1764, %v1779
    %v1782 = vunpack.c.l.s4 1966171168
    %v1783 = vunpack.c.0.s8 %v1782
    %v1784 = vlaneseq
    %v1785 = vshrl.u32 %v1784, 7
    %v1786 = vsub.s32 %v1783, %v1785
    %v1787 = vrot.slane %v1765, %v1786
    %v1789 = vunpack.c.l.s4 1966171168
    %v1790 = vunpack.c.0.s8 %v1789
    %v1791 = vlaneseq
    %v1792 = vshrl.u32 %v1791, 7
    %v1793 = vsub.s32 %v1790, %v1792
    %v1794 = vrot.slane %v1766, %v1793
    %v1795 = vcombine.low %v1773, %v1780
    %v1796 = vcombine.low %v1787, %v1794
    %v1798 = vunpack.c.l.s4 1966171168
    %v1799 = vunpack.c.0.s8 %v1798
    %v1800 = vlaneseq
    %v1801 = vshrl.u32 %v1800, 7
    %v1802 = vsub.s32 %v1799, %v1801
    %v1803 = vrot.slane %v1795, %v1802
    %v1805 = vunpack.c.l.s4 1966171168
    %v1806 = vunpack.c.0.s8 %v1805
    %v1807 = vlaneseq
    %v1808 = vshrl.u32 %v1807, 7
    %v1809 = vsub.s32 %v1806, %v1808
    %v1810 = vrot.slane %v1796, %v1809
    %v1811 = vcombine.low %v1803, %v1810
    %v1812 = vcombine.low %v1551, %v1552
    %v1813 = vcombine.low %v1553, %v1544
    %v1814 = vcombine.low %v1576, %v1590
    %v1815 = vcombine.low %v1591, %v1592
    %v1817 = vunpack.c.l.s4 1966171168
    %v1818 = vunpack.c.0.s8 %v1817
    %v1819 = vlaneseq
    %v1820 = vshrl.u32 %v1819, 7
    %v1821 = vsub.s32 %v1818, %v1820
    %v1822 = vrot.slane %v1812, %v1821
    %v1824 = vunpack.c.l.s4 1966171168
    %v1825 = vunpack.c.0.s8 %v1824
    %v1826 = vlaneseq
    %v1827 = vshrl.u32 %v1826, 7
    %v1828 = vsub.s32 %v1825, %v1827
    %v1829 = vrot.slane %v1813, %v1828
    %v1831 = vunpack.c.l.s4 1966171168
    %v1832 = vunpack.c.0.s8 %v1831
    %v1833 = vlaneseq
    %v1834 = vshrl.u32 %v1833, 7
    %v1835 = vsub.s32 %v1832, %v1834
    %v1836 = vrot.slane %v1814, %v1835
    %v1838 = vunpack.c.l.s4 1966171168
    %v1839 = vunpack.c.0.s8 %v1838
    %v1840 = vlaneseq
    %v1841 = vshrl.u32 %v1840, 7
    %v1842 = vsub.s32 %v1839, %v1841
    %v1843 = vrot.slane %v1815, %v1842
    %v1844 = vcombine.low %v1822, %v1829
    %v1845 = vcombine.low %v1836, %v1843
    %v1847 = vunpack.c.l.s4 1966171168
    %v1848 = vunpack.c.0.s8 %v1847
    %v1849 = vlaneseq
    %v1850 = vshrl.u32 %v1849, 7
    %v1851 = vsub.s32 %v1848, %v1850
    %v1852 = vrot.slane %v1844, %v1851
    %v1854 = vunpack.c.l.s4 1966171168
    %v1855 = vunpack.c.0.s8 %v1854
    %v1856 = vlaneseq
    %v1857 = vshrl.u32 %v1856, 7
    %v1858 = vsub.s32 %v1855, %v1857
    %v1859 = vrot.slane %v1845, %v1858
    %v1860 = vcombine.low %v1852, %v1859
    %v1861 = vcombine.low %v1583, %v1615
    %v1862 = vcombine.low %v1629, %v1630
    %v1863 = vcombine.low %v1631, %v1622
    %v1864 = vcombine.low %v1654, %v1668
    %v1866 = vunpack.c.l.s4 1966171168
    %v1867 = vunpack.c.0.s8 %v1866
    %v1868 = vlaneseq
    %v1869 = vshrl.u32 %v1868, 7
    %v1870 = vsub.s32 %v1867, %v1869
    %v1871 = vrot.slane %v1861, %v1870
    %v1873 = vunpack.c.l.s4 1966171168
    %v1874 = vunpack.c.0.s8 %v1873
    %v1875 = vlaneseq
    %v1876 = vshrl.u32 %v1875, 7
    %v1877 = vsub.s32 %v1874, %v1876
    %v1878 = vrot.slane %v1862, %v1877
    %v1880 = vunpack.c.l.s4 1966171168
    %v1881 = vunpack.c.0.s8 %v1880
    %v1882 = vlaneseq
    %v1883 = vshrl.u32 %v1882, 7
    %v1884 = vsub.s32 %v1881, %v1883
    %v1885 = vrot.slane %v1863, %v1884
    %v1887 = vunpack.c.l.s4 1966171168
    %v1888 = vunpack.c.0.s8 %v1887
    %v1889 = vlaneseq
    %v1890 = vshrl.u32 %v1889, 7
    %v1891 = vsub.s32 %v1888, %v1890
    %v1892 = vrot.slane %v1864, %v1891
    %v1893 = vcombine.low %v1871, %v1878
    %v1894 = vcombine.low %v1885, %v1892
    %v1896 = vunpack.c.l.s4 1966171168
    %v1897 = vunpack.c.0.s8 %v1896
    %v1898 = vlaneseq
    %v1899 = vshrl.u32 %v1898, 7
    %v1900 = vsub.s32 %v1897, %v1899
    %v1901 = vrot.slane %v1893, %v1900
    %v1903 = vunpack.c.l.s4 1966171168
    %v1904 = vunpack.c.0.s8 %v1903
    %v1905 = vlaneseq
    %v1906 = vshrl.u32 %v1905, 7
    %v1907 = vsub.s32 %v1904, %v1906
    %v1908 = vrot.slane %v1894, %v1907
    %v1909 = vcombine.low %v1901, %v1908
    %v1910 = vcombine.low %v1669, %v1670
    %v1911 = vcombine.low %v1661, %v1693
    %v1912 = vcombine.low %v1707, %v1708
    %v1913 = vcombine.low %v1709, %v1700
    %v1915 = vunpack.c.l.s4 1966171168
    %v1916 = vunpack.c.0.s8 %v1915
    %v1917 = vlaneseq
    %v1918 = vshrl.u32 %v1917, 7
    %v1919 = vsub.s32 %v1916, %v1918
    %v1920 = vrot.slane %v1910, %v1919
    %v1922 = vunpack.c.l.s4 1966171168
    %v1923 = vunpack.c.0.s8 %v1922
    %v1924 = vlaneseq
    %v1925 = vshrl.u32 %v1924, 7
    %v1926 = vsub.s32 %v1923, %v1925
    %v1927 = vrot.slane %v1911, %v1926
    %v1929 = vunpack.c.l.s4 1966171168
    %v1930 = vunpack.c.0.s8 %v1929
    %v1931 = vlaneseq
    %v1932 = vshrl.u32 %v1931, 7
    %v1933 = vsub.s32 %v1930, %v1932
    %v1934 = vrot.slane %v1912, %v1933
    %v1936 = vunpack.c.l.s4 1966171168
    %v1937 = vunpack.c.0.s8 %v1936
    %v1938 = vlaneseq
    %v1939 = vshrl.u32 %v1938, 7
    %v1940 = vsub.s32 %v1937, %v1939
    %v1941 = vrot.slane %v1913, %v1940
    %v1942 = vcombine.low %v1920, %v1927
    %v1943 = vcombine.low %v1934, %v1941
    %v1945 = vunpack.c.l.s4 1966171168
    %v1946 = vunpack.c.0.s8 %v1945
    %v1947 = vlaneseq
    %v1948 = vshrl.u32 %v1947, 7
    %v1949 = vsub.s32 %v1946, %v1948
    %v1950 = vrot.slane %v1942, %v1949
    %v1952 = vunpack.c.l.s4 1966171168
    %v1953 = vunpack.c.0.s8 %v1952
    %v1954 = vlaneseq
    %v1955 = vshrl.u32 %v1954, 7
    %v1956 = vsub.s32 %v1953, %v1955
    %v1957 = vrot.slane %v1943, %v1956
    %v1958 = vcombine.low %v1950, %v1957
    %vm1959 = vcmask 367616
    %v1960 = vsel %vm1959, %v1762, 0
    %v1962 = vsel %vm1959, %v1811, 0
    %v1964 = vsel %vm1959, %v1860, 0
    %v1966 = vsel %vm1959, %v1909, 0
    %v1968 = vsel %vm1959, %v1958, 0
    %vm1970 = vcmask 1044480
    %v1972 = vsel %vm1970, %v33, 0
    %1974 = vmatprep.subr.mxu0 0.0
    %1975 = vmatpush1.msra.mxu0 %v28
    %1976 = vmatprep.subr.mxu0 0.0
    %1977 = vmatpush1.msra.mxu0 %v29
    %1978 = vmatprep.subr.mxu0 0.0
    %1979 = vmatpush1.msra.mxu0 %v30
    %1980 = vmatprep.subr.mxu0 0.0
    %1981 = vmatpush1.msra.mxu0 %v31
    %1982 = vmatprep.subr.mxu0 0.0
    %1983 = vmatpush1.msra.mxu0 %v32
    %1984 = vmatprep.subr.mxu0 0.0
    %1985 = vmatpush1.msra.mxu0 %v1972
    %1986 = vmatprep.subr.mxu0 0.0
    %1987 = vmatpush1.msra.mxu0 0.0
    %1988 = vmatprep.subr.mxu0 0.0
    %1989 = vmatpush1.msra.mxu0 0.0
    %1990 = vmatprep.subr.mxu0 0.0
    %1991 = vmatpush1.msra.mxu0 0.0
    %1992 = vmatprep.subr.mxu0 0.0
    %1993 = vmatpush1.msra.mxu0 0.0
    %1994 = vmatprep.subr.mxu0 0.0
    %1995 = vmatpush1.msra.mxu0 0.0
    %1996 = vmatprep.subr.mxu0 0.0
    %1997 = vmatpush1.msra.mxu0 0.0
    %1998 = vmatprep.subr.mxu0 0.0
    %1999 = vmatpush1.msra.mxu0 0.0
    %2000 = vmatprep.subr.mxu0 0.0
    %2001 = vmatpush1.msra.mxu0 0.0
    %2002 = vmatprep.subr.mxu0 0.0
    %2003 = vmatpush1.msra.mxu0 0.0
    %2004 = vmatprep.subr.mxu0 0.0
    %2005 = vmatpush1.msra.mxu0 0.0
    %2006 = vmatprep.subr.mxu0 0.0
    %2007 = vmatpush1.msra.mxu0 0.0
    %2008 = vmatprep.subr.mxu0 0.0
    %2009 = vmatpush1.msra.mxu0 0.0
    %2010 = vmatprep.subr.mxu0 0.0
    %2011 = vmatpush1.msra.mxu0 0.0
    %2012 = vmatprep.subr.mxu0 0.0
    %2013 = vmatpush1.msra.mxu0 0.0
    %2014 = vmatprep.subr.mxu0 0.0
    %2015 = vmatpush1.msra.mxu0 0.0
    %2016 = vmatprep.subr.mxu0 0.0
    %2017 = vmatpush1.msra.mxu0 0.0
    %2018 = vmatprep.subr.mxu0 0.0
    %2019 = vmatpush1.msra.mxu0 0.0
    %2020 = vmatprep.subr.mxu0 0.0
    %2021 = vmatpush1.msra.mxu0 0.0
    %2022 = vmatprep.subr.mxu0 0.0
    %2023 = vmatpush1.msra.mxu0 0.0
    %2024 = vmatprep.subr.mxu0 0.0
    %2025 = vmatpush1.msra.mxu0 0.0
    %2026 = vmatprep.subr.mxu0 0.0
    %2027 = vmatpush1.msra.mxu0 0.0
    %2028 = vmatprep.subr.mxu0 0.0
    %2029 = vmatpush1.msra.mxu0 0.0
    %2030 = vmatprep.subr.mxu0 0.0
    %2031 = vmatpush1.msra.mxu0 0.0
    %2032 = vmatprep.subr.mxu0 0.0
    %2033 = vmatpush1.msra.mxu0 0.0
    %2034 = vmatprep.subr.mxu0 0.0
    %2035 = vmatpush1.msra.mxu0 0.0
    %2036 = vmatprep.subr.mxu0 0.0
    %2037 = vmatpush1.msra.mxu0 0.0
    %2038 = vmatprep.mubr.f32.mxu0 0.0
    %2039 = vmatmul.mubr.f32.gmra.mrb[0].mxu0 %v1960
    %v2040 = vpop.f32.mrb[0].mxu0
    %v2041 = vadd.f32 %v1713, %v2040
    %v2042 = vpop.f32.mrb[0].mxu0
    %2043 = vmatprep.mubr.f32.mxu0 0.0
    %2044 = vmatmul.mubr.f32.gmra.mrb[0].mxu0 %v1962
    %v2045 = vpop.f32.mrb[0].mxu0
    %v2046 = vadd.f32 %v1713, %v2045
    %v2047 = vpop.f32.mrb[0].mxu0
    %2048 = vmatprep.mubr.f32.mxu0 0.0
    %2049 = vmatmul.mubr.f32.gmra.mrb[0].mxu0 %v1964
    %v2050 = vpop.f32.mrb[0].mxu0
    %v2051 = vadd.f32 %v1713, %v2050
    %v2052 = vpop.f32.mrb[0].mxu0
    %2053 = vmatprep.mubr.f32.mxu0 0.0
    %2054 = vmatmul.mubr.f32.gmra.mrb[0].mxu0 %v1966
    %v2055 = vpop.f32.mrb[0].mxu0
    %v2056 = vadd.f32 %v1713, %v2055
    %v2057 = vpop.f32.mrb[0].mxu0
    %2058 = vmatprep.mubr.f32.mxu0 0.0
    %2059 = vmatmul.mubr.f32.gmra.mrb[0].mxu0 %v1968
    %v2060 = vpop.f32.mrb[0].mxu0
    %v2061 = vadd.f32 %v1713, %v2060
    %v2062 = vpop.f32.mrb[0].mxu0
    %2063 = vdwg.mxu0
    %v2064 = vmax.f32 %v2041, 0.0
    %v2065 = vmax.f32 %v2046, 0.0
    %v2066 = vmax.f32 %v2051, 0.0
    %v2067 = vmax.f32 %v2056, 0.0
    %v2068 = vmax.f32 %v2061, 0.0
    %v2074 = vcombine.high %v2064, %v2064
    %v2076 = vunpack.c.l.s4 1966171168
    %v2077 = vunpack.c.0.s8 %v2076
    %v2078 = vlaneseq
    %v2079 = vshrl.u32 %v2078, 7
    %v2080 = vsub.s32 %v2077, %v2079
    %v2081 = vrot.slane %v2064, %v2080
    %v2083 = vunpack.c.l.s4 1966171168
    %v2084 = vunpack.c.0.s8 %v2083
    %v2085 = vlaneseq
    %v2086 = vshrl.u32 %v2085, 7
    %v2087 = vsub.s32 %v2084, %v2086
    %v2088 = vrot.slane %v2074, %v2087
    %v2089 = vcombine.high %v2081, %v2081
    %v2090 = vcombine.high %v2088, %v2088
    %v2092 = vunpack.c.l.s4 1966171168
    %v2093 = vunpack.c.0.s8 %v2092
    %v2094 = vlaneseq
    %v2095 = vshrl.u32 %v2094, 7
    %v2096 = vsub.s32 %v2093, %v2095
    %v2097 = vrot.slane %v2081, %v2096
    %v2099 = vunpack.c.l.s4 1966171168
    %v2100 = vunpack.c.0.s8 %v2099
    %v2101 = vlaneseq
    %v2102 = vshrl.u32 %v2101, 7
    %v2103 = vsub.s32 %v2100, %v2102
    %v2104 = vrot.slane %v2088, %v2103
    %v2106 = vunpack.c.l.s4 1966171168
    %v2107 = vunpack.c.0.s8 %v2106
    %v2108 = vlaneseq
    %v2109 = vshrl.u32 %v2108, 7
    %v2110 = vsub.s32 %v2107, %v2109
    %v2111 = vrot.slane %v2089, %v2110
    %v2113 = vunpack.c.l.s4 1966171168
    %v2114 = vunpack.c.0.s8 %v2113
    %v2115 = vlaneseq
    %v2116 = vshrl.u32 %v2115, 7
    %v2117 = vsub.s32 %v2114, %v2116
    %v2118 = vrot.slane %v2090, %v2117
    %v2119 = vcombine.high %v2097, %v2097
    %v2120 = vcombine.high %v2104, %v2104
    %v2121 = vcombine.high %v2111, %v2111
    %v2122 = vcombine.high %v2118, %v2118
    %v2123 = vcombine.high %v2065, %v2065
    %v2125 = vunpack.c.l.s4 1966171168
    %v2126 = vunpack.c.0.s8 %v2125
    %v2127 = vlaneseq
    %v2128 = vshrl.u32 %v2127, 7
    %v2129 = vsub.s32 %v2126, %v2128
    %v2130 = vrot.slane %v2065, %v2129
    %v2132 = vunpack.c.l.s4 1966171168
    %v2133 = vunpack.c.0.s8 %v2132
    %v2134 = vlaneseq
    %v2135 = vshrl.u32 %v2134, 7
    %v2136 = vsub.s32 %v2133, %v2135
    %v2137 = vrot.slane %v2123, %v2136
    %v2138 = vcombine.high %v2130, %v2130
    %v2139 = vcombine.high %v2137, %v2137
    %v2141 = vunpack.c.l.s4 1966171168
    %v2142 = vunpack.c.0.s8 %v2141
    %v2143 = vlaneseq
    %v2144 = vshrl.u32 %v2143, 7
    %v2145 = vsub.s32 %v2142, %v2144
    %v2146 = vrot.slane %v2130, %v2145
    %v2148 = vunpack.c.l.s4 1966171168
    %v2149 = vunpack.c.0.s8 %v2148
    %v2150 = vlaneseq
    %v2151 = vshrl.u32 %v2150, 7
    %v2152 = vsub.s32 %v2149, %v2151
    %v2153 = vrot.slane %v2137, %v2152
    %v2155 = vunpack.c.l.s4 1966171168
    %v2156 = vunpack.c.0.s8 %v2155
    %v2157 = vlaneseq
    %v2158 = vshrl.u32 %v2157, 7
    %v2159 = vsub.s32 %v2156, %v2158
    %v2160 = vrot.slane %v2138, %v2159
    %v2162 = vunpack.c.l.s4 1966171168
    %v2163 = vunpack.c.0.s8 %v2162
    %v2164 = vlaneseq
    %v2165 = vshrl.u32 %v2164, 7
    %v2166 = vsub.s32 %v2163, %v2165
    %v2167 = vrot.slane %v2139, %v2166
    %v2168 = vcombine.high %v2146, %v2146
    %v2169 = vcombine.high %v2160, %v2160
    %v2170 = vcombine.high %v2167, %v2167
    %v2171 = vcombine.high %v2066, %v2066
    %v2173 = vunpack.c.l.s4 1966171168
    %v2174 = vunpack.c.0.s8 %v2173
    %v2175 = vlaneseq
    %v2176 = vshrl.u32 %v2175, 7
    %v2177 = vsub.s32 %v2174, %v2176
    %v2178 = vrot.slane %v2066, %v2177
    %v2180 = vunpack.c.l.s4 1966171168
    %v2181 = vunpack.c.0.s8 %v2180
    %v2182 = vlaneseq
    %v2183 = vshrl.u32 %v2182, 7
    %v2184 = vsub.s32 %v2181, %v2183
    %v2185 = vrot.slane %v2171, %v2184
    %v2186 = vcombine.high %v2178, %v2178
    %v2187 = vcombine.high %v2185, %v2185
    %v2189 = vunpack.c.l.s4 1966171168
    %v2190 = vunpack.c.0.s8 %v2189
    %v2191 = vlaneseq
    %v2192 = vshrl.u32 %v2191, 7
    %v2193 = vsub.s32 %v2190, %v2192
    %v2194 = vrot.slane %v2178, %v2193
    %v2196 = vunpack.c.l.s4 1966171168
    %v2197 = vunpack.c.0.s8 %v2196
    %v2198 = vlaneseq
    %v2199 = vshrl.u32 %v2198, 7
    %v2200 = vsub.s32 %v2197, %v2199
    %v2201 = vrot.slane %v2185, %v2200
    %v2203 = vunpack.c.l.s4 1966171168
    %v2204 = vunpack.c.0.s8 %v2203
    %v2205 = vlaneseq
    %v2206 = vshrl.u32 %v2205, 7
    %v2207 = vsub.s32 %v2204, %v2206
    %v2208 = vrot.slane %v2186, %v2207
    %v2210 = vunpack.c.l.s4 1966171168
    %v2211 = vunpack.c.0.s8 %v2210
    %v2212 = vlaneseq
    %v2213 = vshrl.u32 %v2212, 7
    %v2214 = vsub.s32 %v2211, %v2213
    %v2215 = vrot.slane %v2187, %v2214
    %v2216 = vcombine.high %v2194, %v2194
    %v2217 = vcombine.high %v2201, %v2201
    %v2218 = vcombine.high %v2215, %v2215
    %v2219 = vcombine.high %v2067, %v2067
    %v2221 = vunpack.c.l.s4 1966171168
    %v2222 = vunpack.c.0.s8 %v2221
    %v2223 = vlaneseq
    %v2224 = vshrl.u32 %v2223, 7
    %v2225 = vsub.s32 %v2222, %v2224
    %v2226 = vrot.slane %v2067, %v2225
    %v2228 = vunpack.c.l.s4 1966171168
    %v2229 = vunpack.c.0.s8 %v2228
    %v2230 = vlaneseq
    %v2231 = vshrl.u32 %v2230, 7
    %v2232 = vsub.s32 %v2229, %v2231
    %v2233 = vrot.slane %v2219, %v2232
    %v2234 = vcombine.high %v2226, %v2226
    %v2235 = vcombine.high %v2233, %v2233
    %v2237 = vunpack.c.l.s4 1966171168
    %v2238 = vunpack.c.0.s8 %v2237
    %v2239 = vlaneseq
    %v2240 = vshrl.u32 %v2239, 7
    %v2241 = vsub.s32 %v2238, %v2240
    %v2242 = vrot.slane %v2226, %v2241
    %v2244 = vunpack.c.l.s4 1966171168
    %v2245 = vunpack.c.0.s8 %v2244
    %v2246 = vlaneseq
    %v2247 = vshrl.u32 %v2246, 7
    %v2248 = vsub.s32 %v2245, %v2247
    %v2249 = vrot.slane %v2233, %v2248
    %v2251 = vunpack.c.l.s4 1966171168
    %v2252 = vunpack.c.0.s8 %v2251
    %v2253 = vlaneseq
    %v2254 = vshrl.u32 %v2253, 7
    %v2255 = vsub.s32 %v2252, %v2254
    %v2256 = vrot.slane %v2234, %v2255
    %v2258 = vunpack.c.l.s4 1966171168
    %v2259 = vunpack.c.0.s8 %v2258
    %v2260 = vlaneseq
    %v2261 = vshrl.u32 %v2260, 7
    %v2262 = vsub.s32 %v2259, %v2261
    %v2263 = vrot.slane %v2235, %v2262
    %v2264 = vcombine.high %v2242, %v2242
    %v2265 = vcombine.high %v2249, %v2249
    %v2266 = vcombine.high %v2256, %v2256
    %v2267 = vcombine.high %v2263, %v2263
    %v2268 = vcombine.high %v2068, %v2068
    %v2270 = vunpack.c.l.s4 1966171168
    %v2271 = vunpack.c.0.s8 %v2270
    %v2272 = vlaneseq
    %v2273 = vshrl.u32 %v2272, 7
    %v2274 = vsub.s32 %v2271, %v2273
    %v2275 = vrot.slane %v2068, %v2274
    %v2277 = vunpack.c.l.s4 1966171168
    %v2278 = vunpack.c.0.s8 %v2277
    %v2279 = vlaneseq
    %v2280 = vshrl.u32 %v2279, 7
    %v2281 = vsub.s32 %v2278, %v2280
    %v2282 = vrot.slane %v2268, %v2281
    %v2283 = vcombine.high %v2275, %v2275
    %v2284 = vcombine.high %v2282, %v2282
    %v2286 = vunpack.c.l.s4 1966171168
    %v2287 = vunpack.c.0.s8 %v2286
    %v2288 = vlaneseq
    %v2289 = vshrl.u32 %v2288, 7
    %v2290 = vsub.s32 %v2287, %v2289
    %v2291 = vrot.slane %v2275, %v2290
    %v2293 = vunpack.c.l.s4 1966171168
    %v2294 = vunpack.c.0.s8 %v2293
    %v2295 = vlaneseq
    %v2296 = vshrl.u32 %v2295, 7
    %v2297 = vsub.s32 %v2294, %v2296
    %v2298 = vrot.slane %v2282, %v2297
    %v2300 = vunpack.c.l.s4 1966171168
    %v2301 = vunpack.c.0.s8 %v2300
    %v2302 = vlaneseq
    %v2303 = vshrl.u32 %v2302, 7
    %v2304 = vsub.s32 %v2301, %v2303
    %v2305 = vrot.slane %v2283, %v2304
    %v2307 = vunpack.c.l.s4 1966171168
    %v2308 = vunpack.c.0.s8 %v2307
    %v2309 = vlaneseq
    %v2310 = vshrl.u32 %v2309, 7
    %v2311 = vsub.s32 %v2308, %v2310
    %v2312 = vrot.slane %v2284, %v2311
    %v2313 = vcombine.high %v2298, %v2298
    %v2314 = vcombine.high %v2305, %v2305
    %v2347 = vmax.f32 %v2097, %v2111
    %v2348 = vmax.f32 %v2119, %v2121
    %v2349 = vmax.f32 %v2118, %v2120
    %v2350 = vmax.f32 %v2122, %v2146
    %v2351 = vmax.f32 %v2168, %v2169
    %v2352 = vmax.f32 %v2153, %v2167
    %v2353 = vmax.f32 %v2170, %v2194
    %v2354 = vmax.f32 %v2208, %v2216
    %v2355 = vmax.f32 %v2201, %v2215
    %v2356 = vmax.f32 %v2217, %v2218
    %v2357 = vmax.f32 %v2256, %v2264
    %v2358 = vmax.f32 %v2266, %v2249
    %v2359 = vmax.f32 %v2265, %v2267
    %v2360 = vmax.f32 %v2291, %v2305
    %v2361 = vmax.f32 %v2314, %v2298
    %v2362 = vmax.f32 %v2312, %v2313
    %v2371 = vcombine.low %v2347, %v2349
    %v2372 = vcombine.low %v2351, %v2353
    %v2373 = vcombine.low %v2355, %v2357
    %v2374 = vcombine.low %v2359, %v2361
    %v2376 = vunpack.c.l.s4 1966171168
    %v2377 = vunpack.c.0.s8 %v2376
    %v2378 = vlaneseq
    %v2379 = vshrl.u32 %v2378, 7
    %v2380 = vsub.s32 %v2377, %v2379
    %v2381 = vrot.slane %v2371, %v2380
    %v2383 = vunpack.c.l.s4 1966171168
    %v2384 = vunpack.c.0.s8 %v2383
    %v2385 = vlaneseq
    %v2386 = vshrl.u32 %v2385, 7
    %v2387 = vsub.s32 %v2384, %v2386
    %v2388 = vrot.slane %v2372, %v2387
    %v2390 = vunpack.c.l.s4 1966171168
    %v2391 = vunpack.c.0.s8 %v2390
    %v2392 = vlaneseq
    %v2393 = vshrl.u32 %v2392, 7
    %v2394 = vsub.s32 %v2391, %v2393
    %v2395 = vrot.slane %v2373, %v2394
    %v2397 = vunpack.c.l.s4 1966171168
    %v2398 = vunpack.c.0.s8 %v2397
    %v2399 = vlaneseq
    %v2400 = vshrl.u32 %v2399, 7
    %v2401 = vsub.s32 %v2398, %v2400
    %v2402 = vrot.slane %v2374, %v2401
    %v2403 = vcombine.low %v2381, %v2388
    %v2404 = vcombine.low %v2395, %v2402
    %v2406 = vunpack.c.l.s4 1966171168
    %v2407 = vunpack.c.0.s8 %v2406
    %v2408 = vlaneseq
    %v2409 = vshrl.u32 %v2408, 7
    %v2410 = vsub.s32 %v2407, %v2409
    %v2411 = vrot.slane %v2403, %v2410
    %v2413 = vunpack.c.l.s4 1966171168
    %v2414 = vunpack.c.0.s8 %v2413
    %v2415 = vlaneseq
    %v2416 = vshrl.u32 %v2415, 7
    %v2417 = vsub.s32 %v2414, %v2416
    %v2418 = vrot.slane %v2404, %v2417
    %v2419 = vcombine.low %v2411, %v2418
    %v2429 = vcombine.low %v2348, %v2350
    %v2430 = vcombine.low %v2352, %v2354
    %v2431 = vcombine.low %v2356, %v2358
    %v2432 = vcombine.low %v2360, %v2362
    %v2434 = vunpack.c.l.s4 1966171168
    %v2435 = vunpack.c.0.s8 %v2434
    %v2436 = vlaneseq
    %v2437 = vshrl.u32 %v2436, 7
    %v2438 = vsub.s32 %v2435, %v2437
    %v2439 = vrot.slane %v2429, %v2438
    %v2441 = vunpack.c.l.s4 1966171168
    %v2442 = vunpack.c.0.s8 %v2441
    %v2443 = vlaneseq
    %v2444 = vshrl.u32 %v2443, 7
    %v2445 = vsub.s32 %v2442, %v2444
    %v2446 = vrot.slane %v2430, %v2445
    %v2448 = vunpack.c.l.s4 1966171168
    %v2449 = vunpack.c.0.s8 %v2448
    %v2450 = vlaneseq
    %v2451 = vshrl.u32 %v2450, 7
    %v2452 = vsub.s32 %v2449, %v2451
    %v2453 = vrot.slane %v2431, %v2452
    %v2455 = vunpack.c.l.s4 1966171168
    %v2456 = vunpack.c.0.s8 %v2455
    %v2457 = vlaneseq
    %v2458 = vshrl.u32 %v2457, 7
    %v2459 = vsub.s32 %v2456, %v2458
    %v2460 = vrot.slane %v2432, %v2459
    %v2461 = vcombine.low %v2439, %v2446
    %v2462 = vcombine.low %v2453, %v2460
    %v2464 = vunpack.c.l.s4 1966171168
    %v2465 = vunpack.c.0.s8 %v2464
    %v2466 = vlaneseq
    %v2467 = vshrl.u32 %v2466, 7
    %v2468 = vsub.s32 %v2465, %v2467
    %v2469 = vrot.slane %v2461, %v2468
    %v2471 = vunpack.c.l.s4 1966171168
    %v2472 = vunpack.c.0.s8 %v2471
    %v2473 = vlaneseq
    %v2474 = vshrl.u32 %v2473, 7
    %v2475 = vsub.s32 %v2472, %v2474
    %v2476 = vrot.slane %v2462, %v2475
    %v2477 = vcombine.low %v2469, %v2476
    %2478 = vrot.lane.b32.xlu0 %v2477, 30
    %v2479 = vpop.permute.xlu0 %2478
    %v2481 = vsel %vm1381, %v2419, %v2479
    %v2482 = vlaneseq
    %v2483 = vshrl.u32 %v2482, 7
    %v2484 = vsub.s32 0, %v2483
    %v2485 = vrot.slane %v43, %v2484
    %vm2486 = vcmask 490496
    %v2488 = vsel %vm2486, %v2481, 0
    %vm2490 = vcmask 1043456
    %v2492 = vsel %vm2490, %v42, 0
    %2494 = vmatprep.subr.mxu0 0.0
    %2495 = vmatpush1.msra.mxu0 %v35
    %2496 = vmatprep.subr.mxu0 0.0
    %2497 = vmatpush1.msra.mxu0 %v36
    %2498 = vmatprep.subr.mxu0 0.0
    %2499 = vmatpush1.msra.mxu0 %v37
    %2500 = vmatprep.subr.mxu0 0.0
    %2501 = vmatpush1.msra.mxu0 %v38
    %2502 = vmatprep.subr.mxu0 0.0
    %2503 = vmatpush1.msra.mxu0 %v39
    %2504 = vmatprep.subr.mxu0 0.0
    %2505 = vmatpush1.msra.mxu0 %v40
    %2506 = vmatprep.subr.mxu0 0.0
    %2507 = vmatpush1.msra.mxu0 %v41
    %2508 = vmatprep.subr.mxu0 0.0
    %2509 = vmatpush1.msra.mxu0 %v2492
    %2510 = vmatprep.subr.mxu0 0.0
    %2511 = vmatpush1.msra.mxu0 0.0
    %2512 = vmatprep.subr.mxu0 0.0
    %2513 = vmatpush1.msra.mxu0 0.0
    %2514 = vmatprep.subr.mxu0 0.0
    %2515 = vmatpush1.msra.mxu0 0.0
    %2516 = vmatprep.subr.mxu0 0.0
    %2517 = vmatpush1.msra.mxu0 0.0
    %2518 = vmatprep.subr.mxu0 0.0
    %2519 = vmatpush1.msra.mxu0 0.0
    %2520 = vmatprep.subr.mxu0 0.0
    %2521 = vmatpush1.msra.mxu0 0.0
    %2522 = vmatprep.subr.mxu0 0.0
    %2523 = vmatpush1.msra.mxu0 0.0
    %2524 = vmatprep.subr.mxu0 0.0
    %2525 = vmatpush1.msra.mxu0 0.0
    %2526 = vmatprep.subr.mxu0 0.0
    %2527 = vmatpush1.msra.mxu0 0.0
    %2528 = vmatprep.subr.mxu0 0.0
    %2529 = vmatpush1.msra.mxu0 0.0
    %2530 = vmatprep.subr.mxu0 0.0
    %2531 = vmatpush1.msra.mxu0 0.0
    %2532 = vmatprep.subr.mxu0 0.0
    %2533 = vmatpush1.msra.mxu0 0.0
    %2534 = vmatprep.subr.mxu0 0.0
    %2535 = vmatpush1.msra.mxu0 0.0
    %2536 = vmatprep.subr.mxu0 0.0
    %2537 = vmatpush1.msra.mxu0 0.0
    %2538 = vmatprep.subr.mxu0 0.0
    %2539 = vmatpush1.msra.mxu0 0.0
    %2540 = vmatprep.subr.mxu0 0.0
    %2541 = vmatpush1.msra.mxu0 0.0
    %2542 = vmatprep.subr.mxu0 0.0
    %2543 = vmatpush1.msra.mxu0 0.0
    %2544 = vmatprep.subr.mxu0 0.0
    %2545 = vmatpush1.msra.mxu0 0.0
    %2546 = vmatprep.subr.mxu0 0.0
    %2547 = vmatpush1.msra.mxu0 0.0
    %2548 = vmatprep.subr.mxu0 0.0
    %2549 = vmatpush1.msra.mxu0 0.0
    %2550 = vmatprep.subr.mxu0 0.0
    %2551 = vmatpush1.msra.mxu0 0.0
    %2552 = vmatprep.subr.mxu0 0.0
    %2553 = vmatpush1.msra.mxu0 0.0
    %2554 = vmatprep.subr.mxu0 0.0
    %2555 = vmatpush1.msra.mxu0 0.0
    %2556 = vmatprep.subr.mxu0 0.0
    %2557 = vmatpush1.msra.mxu0 0.0
    %2558 = vmatprep.mubr.f32.mxu0 0.0
    %2559 = vmatmul.mubr.f32.gmra.mrb[0].mxu0 %v2488
    %v2560 = vpop.f32.mrb[0].mxu0
    %v2561 = vadd.f32 %v2485, %v2560
    %v2562 = vpop.f32.mrb[0].mxu0
    %2563 = vdwg.mxu0
    %v2564 = vmax.f32 %v2561, 0.0
    %v2565 = vlaneseq
    %v2566 = vshrl.u32 %v2565, 7
    %v2567 = vsub.s32 0, %v2566
    %v2568 = vrot.slane %v44, %v2567
    %v2569 = vmul.f32 %v2564, %v2568
    %vm2570 = vcmask 56320
    %v2571 = vsel %vm2570, %v2569, 0.0
    %2572 = vadd.xlane.f32.xlu0 %v2571
    %v2573 = vpop.xlane.xlu0 %2572
    %v2574 = vlaneseq
    %v2575 = vshrl.u32 %v2574, 7
    %v2576 = vsub.s32 0, %v2575
    %v2577 = vrot.slane %v45, %v2576
    %v2578 = vadd.f32 %v2573, %v2577
    %v2579 = vsub.f32 0.0, %v2578
    %v2580 = vmul.f32 %v2579, 1.442695
    %v2581 = vpow.pop %v2580
    %v2582 = vadd.f32 %v2581, 1.0
    %v2583 = vrcp.pop %v2582
    %vm2584 = vcmask 7168
    %2585 = vst.msk [vmem:[%s2] sm:$0xff] %vm2584, %v2583
    // Predicated region
    $region14: #{ecnn_forward.1} parent=1 // pred_check
      _
    $region15: #{ecnn_forward.1} parent=1 // pred_check_branch
      %2587 = sbr.rel (0) target = $region17
    $region16: #{ecnn_forward.1} parent=1 // pred_region
      _
    $region17: #{ecnn_forward.1} parent=1 // pred_fallthru
      _
    // Predicated region
    $region18: #{ecnn_forward.1} parent=1 // pred_check
      _
    $region19: #{ecnn_forward.1} parent=1 // pred_check_branch
      %2589 = sbr.rel (0) target = $region21
    $region20: #{ecnn_forward.1} parent=1 // pred_region
      _
    $region21: #{ecnn_forward.1} parent=1 // pred_fallthru
      _
    %2590 = vsyncpa [#allocation3], 1

</llo_original>
